<compile_context>
chip_gen: v7x
topology: tpu7x:2x2x1
jax: 0.10.0
libtpu: 0.0.40
codegen_flags: <defaults>
</compile_context>

<pallas_src>
import functools

import jax
import jax.numpy as jnp
from jax.experimental import pallas as pl
from jax.experimental.pallas import tpu as pltpu


# ----------------------------------------------------------------------------
# Kernel
# ----------------------------------------------------------------------------
def _axial_attention_kernel(x_ref, wbig_ref, bbig_ref, estack_ref, red3_ref,
                            rep_ref, cmap_ref, evbig_ref, emask_ref, gsum_ref,
                            m01_ref, rept_ref, b3_ref, o_ref, p_all_ref,
                            *, groups, span, block_b, group_channels, mxu_dtype):
    """One block of `block_b` batch elements per grid step."""
    G, N, Bb, GC = groups, span, block_b, group_channels
    GN = G * N
    LQK = GC * G * N            # = 2 * (GC//2) * GN : stacked q+k lane width
    R = Bb * N
    f32 = jnp.float32

    def mm(a, b):
        # MXU matmul with selectable operand dtype, f32 accumulation.
        return jnp.dot(a.astype(mxu_dtype), b.astype(mxu_dtype),
                       preferred_element_type=f32)

    x = x_ref[...]                                              # [R, C_in]

    # ---- (1) fused QKV projection: one wide MXU matmul + folded BN1 bias ----
    big = mm(x, wbig_ref[...]) + bbig_ref[...]                  # [R, LQK + C_out]
    qkw = big[:, :LQK]                                          # q|k raw (aligned slice)
    v = big[:, LQK:]                                            # [R, C_out]

    # ---- (2) relative-embedding weighting (Eq/Ek), broadcast over Bb --------
    estack = estack_ref[...]                                    # [N, LQK]
    if Bb == 1:
        qkw = qkw * estack
    else:
        qkw = (qkw.reshape(Bb, N, LQK) * estack[None]).reshape(R, LQK)

    # ---- (3) channel-chunk reductions on the MXU (BN2 scales folded in) -----
    qe2 = mm(qkw, red3_ref[0])            # [R, GN]   qe
    keq2 = mm(qkw, red3_ref[1])           # [R, GN]   a_qk * ke
    extp = mm(qkw, red3_ref[2])           # [R, GN]   a_qe*qe + a_ke*ke

    rep = rep_ref[...]                    # [GN, N]  tile(eye(N), (G,1))
    blk = cmap_ref[0]                     # [GN, GN] block-diagonal 0/1 mask
    bias = cmap_ref[1]                    # [GN, GN] BN2 bias on diag, -1e30 off

    # ---- (4) per-batch-element similarity + softmax (batched matmul core) ---
    for b in range(Bb):                   # static unroll, Bb <= 4
        r0 = b * N
        qe_b = qe2[r0:r0 + N, :]          # [N, GN] (sublane-aligned slices)
        keq_b = keq2[r0:r0 + N, :]
        ext_b = extp[r0:r0 + N, :]

        # query_key, contracting the position axis (implicit small LHS transpose,
        # kept deliberately: see header note on review item 9).
        qk = jax.lax.dot_general(qe_b.astype(mxu_dtype), keq_b.astype(mxu_dtype),
                                 (((0,), (0,)), ((), ())),
                                 preferred_element_type=f32)    # [GN, GN]
        # qe/ke additive terms: replication matmul instead of sublane concat.
        ext = mm(rep, ext_b)                                    # [GN, GN]
        sim = (qk + ext) * blk + bias                           # folded BN2 + mask

        # softmax over the key axis, f32 (off-diagonal blocks -> exactly 0)
        mx = jnp.max(sim, axis=-1, keepdims=True)
        p = jnp.exp(sim - mx)
        denom = jnp.sum(p, axis=-1, keepdims=True)
        probs = p * pl.reciprocal(denom, approx=True)           # EUP slot

        # collapse the block-diagonal probabilities to [GN, N] (MXU, no concat)
        p_all_ref[b * GN:(b + 1) * GN, :] = mm(probs, rep)

    # ---- (5) batched epilogue over all Bb*GN rows ----------------------------
    p_all = p_all_ref[...]                                      # [Bb*GN, N]

    # attention_map (value RHS is per batch element)
    if Bb == 1:
        am = mm(p_all, v)                                       # [GN, C_out]
    else:
        am = jnp.einsum('brn,bnc->brc',
                        p_all.reshape(Bb, GN, N).astype(mxu_dtype),
                        v.reshape(Bb, N, -1).astype(mxu_dtype),
                        preferred_element_type=f32).reshape(Bb * GN, -1)

    # attention_map_embedded: two MXU matmuls + one masked multiply
    ame_pre = mm(p_all, evbig_ref[...])                         # [Bb*GN, N*GC]
    emask = emask_ref[...]                                      # [GN, N*GC]
    if Bb == 1:
        ame_pre = ame_pre * emask
    else:
        ame_pre = (ame_pre.reshape(Bb, GN, -1) * emask[None]).reshape(Bb * GN, -1)
    ame = mm(ame_pre, gsum_ref[...])                            # [Bb*GN, C_out]

    # folded BN3 + group-block reduction (matmul with block-diagonal constant)
    m0 = m01_ref[0]                                             # [GN, C_out]
    m1 = m01_ref[1]
    if Bb == 1:
        comb = am * m0 + ame * m1
    else:
        comb = (am.reshape(Bb, GN, -1) * m0[None]
                + ame.reshape(Bb, GN, -1) * m1[None]).reshape(Bb * GN, -1)

    out = mm(rept_ref[...], comb) + b3_ref[...]                 # [Bb*N, C_out]
    # single store per grid step (no outs list / concatenate).
    # NOTE: for Bb >= 4 a lane-dense [N, Bb*C_out] output layout would avoid
    # masked partial stores on writeback (review item 5); at Bb <= 2 the
    # C_out-lane block is unavoidable and tiny.
    o_ref[...] = out.astype(o_ref.dtype)


# ----------------------------------------------------------------------------
# Wrapper: parameter folding + pallas_call
# ----------------------------------------------------------------------------
def _pick_batch_block(B, N, max_rows=512, max_block=4):
    """Largest divisor of B with Bb <= max_block, Bb*N <= max_rows and at least
    two grid steps when B >= 2 (so v7x's two TensorCores both get work)."""
    bb = max(1, min(B, max_block, max_rows // max(N, 1)))
    if B >= 2:
        bb = min(bb, max(1, B // 2))
    bb = max(1, bb)
    while B % bb:
        bb -= 1
    return bb


def _fold_params(params, *, groups, span, block_b, mxu_dtype, eps=1e-5):
    G, N, Bb = groups, span, block_b
    f32 = jnp.float32

    W = params["w"].astype(f32)                       # [2*C_out, C_in]
    two_c_out, C_in = W.shape
    C_out = two_c_out // 2
    GC = C_out // G
    GCQ = GC // 2
    GN = G * N
    LQK = 2 * GCQ * GN
    NGC = N * GC

    # ---- fold BN1 into the 1x1 conv ----
    g1, be1, m1_, v1 = [p.astype(f32) for p in params["bn1"]]
    sc1 = g1 / jnp.sqrt(v1 + eps)
    W_eff = (W * sc1[:, None]).T                      # [C_in, 2*C_out]
    b1 = be1 - sc1 * m1_                              # [2*C_out]

    # ---- relative embeddings ----
    rel = params["rel_emb"].astype(f32)               # [2*GC, 2*span-1]
    idx = (jnp.arange(N)[:, None] - jnp.arange(N)[None, :] + N - 1).reshape(-1)
    emb = rel[:, idx].reshape(2 * GC, N, N)
    Eq, Ek, Ev = emb[:GCQ], emb[GCQ:2 * GCQ], emb[2 * GCQ:]

    # ---- fused projection weight WBIG: columns ordered
    #      q-half (c, g, j), k-half (c, g, j), v (g, c); the per-channel value
    #      is broadcast across the j lanes (done via column repetition). ----
    g_ar = jnp.arange(G)
    c_ar = jnp.arange(GCQ)
    qidx = jnp.broadcast_to(c_ar[:, None, None] + g_ar[None, :, None] * (2 * GC),
                            (GCQ, G, N)).reshape(-1)            # [GCQ*GN]
    kidx = qidx + GCQ
    vidx = (g_ar[:, None] * (2 * GC) + 2 * GCQ + jnp.arange(GC)[None, :]).reshape(-1)
    cols = jnp.concatenate([qidx, kidx, vidx])
    WBIG = W_eff[:, cols]                             # [C_in, LQK + C_out]
    BBIG = b1[cols][None, :]                          # [1, LQK + C_out]

    # Eq/Ek stacked in the same (c, g, j) lane order, NOT tiled by Bb: [N, LQK]
    Eq_l = jnp.transpose(jnp.tile(Eq, (1, 1, G)), (1, 0, 2)).reshape(N, GCQ * GN)
    Ek_l = jnp.transpose(jnp.tile(Ek, (1, 1, G)), (1, 0, 2)).reshape(N, GCQ * GN)
    ESTACK = jnp.concatenate([Eq_l, Ek_l], axis=1)

    # ---- fold BN2 (similarity normalization) into the reduction matrices ----
    g2, be2, m2_, v2 = [p.astype(f32) for p in params["bn2"]]
    sc2 = g2 / jnp.sqrt(v2 + eps)
    c2 = be2 - sc2 * m2_
    a_qk, a_qe, a_ke = sc2[:G], sc2[G:2 * G], sc2[2 * G:]
    bias2 = c2[:G] + c2[G:2 * G] + c2[2 * G:]

    eye_gn = jnp.eye(GN, dtype=f32)
    blockI = jnp.tile(eye_gn, (GCQ, 1))               # [GCQ*GN, GN]
    zeros = jnp.zeros_like(blockI)
    aqk_c = jnp.repeat(a_qk, N)[None, :]
    aqe_c = jnp.repeat(a_qe, N)[None, :]
    ake_c = jnp.repeat(a_ke, N)[None, :]
    REDQ = jnp.concatenate([blockI, zeros], axis=0)                   # -> qe
    REDK = jnp.concatenate([zeros, blockI * aqk_c], axis=0)           # -> a_qk*ke
    REDE = jnp.concatenate([blockI * aqe_c, blockI * ake_c], axis=0)  # -> a_qe*qe + a_ke*ke
    RED3 = jnp.stack([REDQ, REDK, REDE], axis=0)      # [3, LQK, GN]

    # replication matrix (qe/ke additive terms, value repeat, probs collapse)
    REP = jnp.tile(jnp.eye(N, dtype=f32), (G, 1))     # [GN, N]

    # block-diagonal mask + folded BN2 bias (off-diagonal -> -1e30 so the
    # softmax probabilities are EXACTLY zero off the diagonal blocks)
    row_g = jnp.arange(GN) // N
    blk = row_g[:, None] == row_g[None, :]
    BLK = blk.astype(f32)
    BIAS = jnp.where(blk, jnp.broadcast_to(bias2[row_g][None, :], (GN, GN)),
                     -1e30).astype(f32)
    CMAP = jnp.stack([BLK, BIAS], axis=0)             # [2, GN, GN]

    # ---- value-embedding operands (attention_map_embedded via MXU) ----
    EVBIG = jnp.transpose(Ev, (2, 1, 0)).reshape(N, NGC)                       # [N, N*GC]
    EMASK = jnp.tile(jnp.repeat(jnp.eye(N, dtype=f32), GC, axis=1), (G, 1))    # [GN, N*GC]
    GSUM = jnp.tile(jnp.eye(GC, dtype=f32), (N, G))                            # [N*GC, C_out]

    # ---- fold BN3 (output normalization, interleaved (am, ame) channels) ----
    g3, be3, m3_, v3 = [p.astype(f32) for p in params["bn3"]]
    sc3 = g3 / jnp.sqrt(v3 + eps)
    c3 = be3 - sc3 * m3_
    s0, s1 = sc3[0::2], sc3[1::2]
    col_gc = jnp.arange(C_out) // GC
    blk_c = (row_g[:, None] == col_gc[None, :]).astype(f32)        # [GN, C_out]
    M01 = jnp.stack([blk_c * s0[None, :], blk_c * s1[None, :]], axis=0)
    B3 = (c3[0::2] + c3[1::2]).reshape(1, C_out)

    # block-diagonal (per batch element) G-row-block reduction matrix
    REPT = jnp.kron(jnp.eye(Bb, dtype=f32),
                    jnp.tile(jnp.eye(N, dtype=f32), (1, G)))       # [Bb*N, Bb*GN]

    mx = mxu_dtype
    operands = (WBIG.astype(mx), BBIG, ESTACK, RED3.astype(mx), REP.astype(mx),
                CMAP, EVBIG.astype(mx), EMASK, GSUM.astype(mx), M01,
                REPT.astype(mx), B3)
    dims = dict(C_in=C_in, C_out=C_out, GC=GC, GCQ=GCQ, GN=GN, LQK=LQK, NGC=NGC)
    return operands, dims


def axial_attention_1d(x, params, *, groups, span, block_b=None,
                       mxu_dtype=jnp.float32):
    """x: [B, C_in, N] (PyTorch NCL layout), returns [B, C_out, N].

    `mxu_dtype=jnp.bfloat16` casts MXU operands to bf16 (f32 accumulation,
    softmax stays f32) as recommended for v6e/v7x; the default is f32 for
    numerical parity with the reference (1e-2 tolerance).
    """
    B, C_in, N = x.shape
    assert N == span
    assert N % 8 == 0, "span must be a multiple of 8 for this kernel"
    two_c_out = params["w"].shape[0]
    C_out = two_c_out // 2
    assert C_out % groups == 0 and (C_out // groups) % 2 == 0

    if block_b is None:
        block_b = _pick_batch_block(B, N)
    Bb = block_b
    assert B % Bb == 0

    operands, dims = _fold_params(params, groups=groups, span=span, block_b=Bb,
                                  mxu_dtype=mxu_dtype)
    GC, GN = dims["GC"], dims["GN"]

    # channels-last, rows = (batch, position)
    x2 = jnp.transpose(x, (0, 2, 1)).reshape(B * N, C_in).astype(jnp.float32)

    def const_spec(arr):
        rank = arr.ndim
        return pl.BlockSpec(arr.shape, lambda b, _r=rank: (0,) * _r)

    kernel = functools.partial(_axial_attention_kernel, groups=groups, span=span,
                               block_b=Bb, group_channels=GC, mxu_dtype=mxu_dtype)

    in_specs = [pl.BlockSpec((Bb * N, C_in), lambda b: (b, 0))]    # x (only blocked input)
    in_specs += [const_spec(op) for op in operands]

    out2 = pl.pallas_call(
        kernel,
        out_shape=jax.ShapeDtypeStruct((B * N, C_out), jnp.float32),
        grid_spec=pltpu.PrefetchScalarGridSpec(
            num_scalar_prefetch=0,
            grid=(B // Bb,),
            in_specs=in_specs,
            out_specs=pl.BlockSpec((Bb * N, C_out), lambda b: (b, 0)),
            scratch_shapes=[pltpu.VMEM((Bb * GN, N), jnp.float32)],
        ),
        compiler_params=pltpu.CompilerParams(dimension_semantics=("parallel",)),
    )(x2, *operands)

    return jnp.transpose(out2.reshape(B, N, C_out), (0, 2, 1))     # [B, C_out, N]


# ------------------- pure-JAX reference (torch eval-mode semantics) -------------------
def _bn_eval(x, gamma, beta, mean, var, axis, eps=1e-5):
    shape = [1] * x.ndim
    shape[axis] = x.shape[axis]
    s = gamma / jnp.sqrt(var + eps)
    return x * s.reshape(shape) + (beta - s * mean).reshape(shape)


def reference(x, params, *, groups, span):
    B, C_in, N = x.shape
    w = params["w"]
    two_c_out = w.shape[0]
    C_out = two_c_out // 2
    GC = C_out // groups
    GCQ = GC // 2
    P = jax.lax.Precision.HIGHEST

    qkv = jnp.einsum("oc,bcn->bon", w, x, precision=P)
    qkv = _bn_eval(qkv, *params["bn1"], axis=1)
    qkv = qkv.reshape(B, groups, 2 * GC, N)
    q, k, v = qkv[:, :, :GCQ], qkv[:, :, GCQ:2 * GCQ], qkv[:, :, 2 * GCQ:]

    rel = params["rel_emb"]
    idx = (jnp.arange(span)[:, None] - jnp.arange(span)[None, :] + span - 1).reshape(-1)
    emb = rel[:, idx].reshape(2 * GC, span, span)
    Eq, Ek, Ev = emb[:GCQ], emb[GCQ:2 * GCQ], emb[2 * GCQ:]

    qe = jnp.einsum("bgci,cij->bgij", q, Eq, precision=P)
    ke = jnp.einsum("bgci,cij->bgij", k, Ek, precision=P)
    qk = jnp.einsum("bgci,bgcj->bgij", qe, ke, precision=P)
    sim = jnp.concatenate([qk, qe, ke], axis=1)
    sim = _bn_eval(sim, *params["bn2"], axis=1)
    sim = sim.reshape(B, 3, groups, N, N).sum(axis=1)
    sim = jax.nn.softmax(sim, axis=3)
    am = jnp.einsum("bgij,bgcj->bgci", sim, v, precision=P)
    ame = jnp.einsum("bgij,cij->bgci", sim, Ev, precision=P)
    out = jnp.concatenate([am, ame], axis=-1).reshape(B, 2 * C_out, N)
    out = _bn_eval(out, *params["bn3"], axis=1)
    out = out.reshape(B, C_out, 2, N).sum(axis=2)
    return out


if __name__ == "__main__":
    B, C_in, C_out, span, groups = 2, 32, 32, 16, 4
    GC = C_out // groups

    key = jax.random.PRNGKey(0)
    ks = jax.random.split(key, 16)

    def bn_params(kq, n):
        k_g, k_b, k_m, k_v = jax.random.split(kq, 4)
        return (1.0 + 0.1 * jax.random.normal(k_g, (n,), jnp.float32),
                0.1 * jax.random.normal(k_b, (n,), jnp.float32),
                0.1 * jax.random.normal(k_m, (n,), jnp.float32),
                0.5 + jnp.abs(jax.random.normal(k_v, (n,), jnp.float32)))

    params = {
        "w": 0.1 * jax.random.normal(ks[0], (2 * C_out, C_in), jnp.float32),
        "rel_emb": jax.random.normal(ks[1], (2 * GC, 2 * span - 1), jnp.float32),
        "bn1": bn_params(ks[2], 2 * C_out),
        "bn2": bn_params(ks[3], 3 * groups),
        "bn3": bn_params(ks[4], 2 * C_out),
    }
    x = jax.random.normal(ks[5], (B, C_in, span), jnp.float32)

    out = axial_attention_1d(x, params, groups=groups, span=span)
    out = jax.block_until_ready(out)

    ref = reference(x, params, groups=groups, span=span)
    err = float(jnp.max(jnp.abs(out - ref)))
    assert out.shape == (B, C_out, span), out.shape
    # tolerance accounts for f32 MXU passes + approximate reciprocal in the softmax
    assert err < 1e-2, f"max abs error {err}"
    print("KERNEL_OK")
</pallas_src>

<mosaic_0001>
module attributes {stable_mosaic.version = 11 : i64} {
  func.func @_axial_attention_kernel(%arg0: i32, %arg1: memref<16x32xf32, #tpu.memory_space<vmem>>, %arg2: memref<32x544xf32, #tpu.memory_space<vmem>>, %arg3: memref<1x544xf32, #tpu.memory_space<vmem>>, %arg4: memref<16x512xf32, #tpu.memory_space<vmem>>, %arg5: memref<3x512x64xf32, #tpu.memory_space<vmem>>, %arg6: memref<64x16xf32, #tpu.memory_space<vmem>>, %arg7: memref<2x64x64xf32, #tpu.memory_space<vmem>>, %arg8: memref<16x128xf32, #tpu.memory_space<vmem>>, %arg9: memref<64x128xf32, #tpu.memory_space<vmem>>, %arg10: memref<128x32xf32, #tpu.memory_space<vmem>>, %arg11: memref<2x64x32xf32, #tpu.memory_space<vmem>>, %arg12: memref<16x64xf32, #tpu.memory_space<vmem>>, %arg13: memref<1x32xf32, #tpu.memory_space<vmem>>, %arg14: memref<16x32xf32, #tpu.memory_space<vmem>>, %arg15: memref<64x16xf32, #tpu.memory_space<vmem>>) attributes {dimension_semantics = [#tpu.dimension_semantics<parallel>], iteration_bounds = array<i64: 2>, scalar_prefetch = 0 : i64, scratch_operands = 1 : i64, tpu.core_type = #tpu.core_type<tc>, window_params = [{transform_indices = @transform_0, window_bounds = array<i64: 16, 32>}, {pipeline_mode = #tpu.pipeline_mode<synchronous>, transform_indices = @transform_1, window_bounds = array<i64: 32, 544>}, {pipeline_mode = #tpu.pipeline_mode<synchronous>, transform_indices = @transform_2, window_bounds = array<i64: 1, 544>}, {pipeline_mode = #tpu.pipeline_mode<synchronous>, transform_indices = @transform_3, window_bounds = array<i64: 16, 512>}, {pipeline_mode = #tpu.pipeline_mode<synchronous>, transform_indices = @transform_4, window_bounds = array<i64: 3, 512, 64>}, {pipeline_mode = #tpu.pipeline_mode<synchronous>, transform_indices = @transform_5, window_bounds = array<i64: 64, 16>}, {pipeline_mode = #tpu.pipeline_mode<synchronous>, transform_indices = @transform_6, window_bounds = array<i64: 2, 64, 64>}, {pipeline_mode = #tpu.pipeline_mode<synchronous>, transform_indices = @transform_7, window_bounds = array<i64: 16, 128>}, {pipeline_mode = #tpu.pipeline_mode<synchronous>, transform_indices = @transform_8, window_bounds = array<i64: 64, 128>}, {pipeline_mode = #tpu.pipeline_mode<synchronous>, transform_indices = @transform_9, window_bounds = array<i64: 128, 32>}, {pipeline_mode = #tpu.pipeline_mode<synchronous>, transform_indices = @transform_10, window_bounds = array<i64: 2, 64, 32>}, {pipeline_mode = #tpu.pipeline_mode<synchronous>, transform_indices = @transform_11, window_bounds = array<i64: 16, 64>}, {pipeline_mode = #tpu.pipeline_mode<synchronous>, transform_indices = @transform_12, window_bounds = array<i64: 1, 32>}, {transform_indices = @transform_13, window_bounds = array<i64: 16, 32>}]} {
    %c0 = arith.constant 0 : index
    %c0_0 = arith.constant 0 : index
    %0 = vector.load %arg1[%c0, %c0_0] : memref<16x32xf32, #tpu.memory_space<vmem>>, vector<16x32xf32>
    %c0_1 = arith.constant 0 : index
    %c0_2 = arith.constant 0 : index
    %1 = vector.load %arg2[%c0_1, %c0_2] : memref<32x544xf32, #tpu.memory_space<vmem>>, vector<32x544xf32>
    %cst = arith.constant dense<0.000000e+00> : vector<16x544xf32>
    %2 = tpu.matmul %0, %1, %cst {dimension_numbers = #tpu.dot_dimension_numbers<[1], [0], [0], [1], [0, 0, 1, 1], [], []>} : vector<16x32xf32>, vector<32x544xf32>, vector<16x544xf32> -> vector<16x544xf32>
    %c0_3 = arith.constant 0 : index
    %c0_4 = arith.constant 0 : index
    %3 = vector.load %arg3[%c0_3, %c0_4] : memref<1x544xf32, #tpu.memory_space<vmem>>, vector<1x544xf32>
    %4 = vector.broadcast %3 : vector<1x544xf32> to vector<16x544xf32>
    %5 = arith.addf %2, %4 : vector<16x544xf32>
    %6 = vector.extract_strided_slice %5 {offsets = [0, 0], sizes = [16, 512], strides = [1, 1]} : vector<16x544xf32> to vector<16x512xf32>
    %7 = vector.extract_strided_slice %5 {offsets = [0, 512], sizes = [16, 32], strides = [1, 1]} : vector<16x544xf32> to vector<16x32xf32>
    %c0_5 = arith.constant 0 : index
    %c0_6 = arith.constant 0 : index
    %8 = vector.load %arg4[%c0_5, %c0_6] : memref<16x512xf32, #tpu.memory_space<vmem>>, vector<16x512xf32>
    %9 = arith.mulf %6, %8 : vector<16x512xf32>
    %c0_7 = arith.constant 0 : index
    %c0_8 = arith.constant 0 : index
    %c0_9 = arith.constant 0 : index
    %10 = vector.load %arg5[%c0_7, %c0_8, %c0_9] : memref<3x512x64xf32, #tpu.memory_space<vmem>>, vector<1x512x64xf32>
    %11 = vector.shape_cast %10 : vector<1x512x64xf32> to vector<512x64xf32>
    %cst_10 = arith.constant dense<0.000000e+00> : vector<16x64xf32>
    %12 = tpu.matmul %9, %11, %cst_10 {dimension_numbers = #tpu.dot_dimension_numbers<[1], [0], [0], [1], [0, 0, 1, 1], [], []>} : vector<16x512xf32>, vector<512x64xf32>, vector<16x64xf32> -> vector<16x64xf32>
    %c1 = arith.constant 1 : index
    %c0_11 = arith.constant 0 : index
    %c0_12 = arith.constant 0 : index
    %13 = vector.load %arg5[%c1, %c0_11, %c0_12] : memref<3x512x64xf32, #tpu.memory_space<vmem>>, vector<1x512x64xf32>
    %14 = vector.shape_cast %13 : vector<1x512x64xf32> to vector<512x64xf32>
    %cst_13 = arith.constant dense<0.000000e+00> : vector<16x64xf32>
    %15 = tpu.matmul %9, %14, %cst_13 {dimension_numbers = #tpu.dot_dimension_numbers<[1], [0], [0], [1], [0, 0, 1, 1], [], []>} : vector<16x512xf32>, vector<512x64xf32>, vector<16x64xf32> -> vector<16x64xf32>
    %c2 = arith.constant 2 : index
    %c0_14 = arith.constant 0 : index
    %c0_15 = arith.constant 0 : index
    %16 = vector.load %arg5[%c2, %c0_14, %c0_15] : memref<3x512x64xf32, #tpu.memory_space<vmem>>, vector<1x512x64xf32>
    %17 = vector.shape_cast %16 : vector<1x512x64xf32> to vector<512x64xf32>
    %cst_16 = arith.constant dense<0.000000e+00> : vector<16x64xf32>
    %18 = tpu.matmul %9, %17, %cst_16 {dimension_numbers = #tpu.dot_dimension_numbers<[1], [0], [0], [1], [0, 0, 1, 1], [], []>} : vector<16x512xf32>, vector<512x64xf32>, vector<16x64xf32> -> vector<16x64xf32>
    %c0_17 = arith.constant 0 : index
    %c0_18 = arith.constant 0 : index
    %19 = vector.load %arg6[%c0_17, %c0_18] : memref<64x16xf32, #tpu.memory_space<vmem>>, vector<64x16xf32>
    %c0_19 = arith.constant 0 : index
    %c0_20 = arith.constant 0 : index
    %c0_21 = arith.constant 0 : index
    %20 = vector.load %arg7[%c0_19, %c0_20, %c0_21] : memref<2x64x64xf32, #tpu.memory_space<vmem>>, vector<1x64x64xf32>
    %21 = vector.shape_cast %20 : vector<1x64x64xf32> to vector<64x64xf32>
    %c1_22 = arith.constant 1 : index
    %c0_23 = arith.constant 0 : index
    %c0_24 = arith.constant 0 : index
    %22 = vector.load %arg7[%c1_22, %c0_23, %c0_24] : memref<2x64x64xf32, #tpu.memory_space<vmem>>, vector<1x64x64xf32>
    %23 = vector.shape_cast %22 : vector<1x64x64xf32> to vector<64x64xf32>
    %cst_25 = arith.constant dense<0.000000e+00> : vector<64x64xf32>
    %24 = tpu.matmul %12, %15, %cst_25 {dimension_numbers = #tpu.dot_dimension_numbers<[0], [0], [1], [1], [0, 1, 1, 1], [], []>} : vector<16x64xf32>, vector<16x64xf32>, vector<64x64xf32> -> vector<64x64xf32>
    %cst_26 = arith.constant dense<0.000000e+00> : vector<64x64xf32>
    %25 = tpu.matmul %19, %18, %cst_26 {dimension_numbers = #tpu.dot_dimension_numbers<[1], [0], [0], [1], [0, 0, 1, 1], [], []>} : vector<64x16xf32>, vector<16x64xf32>, vector<64x64xf32> -> vector<64x64xf32>
    %26 = arith.addf %24, %25 : vector<64x64xf32>
    %27 = arith.mulf %26, %21 : vector<64x64xf32>
    %28 = arith.addf %27, %23 : vector<64x64xf32>
    %cst_27 = arith.constant dense<0xFF800000> : vector<64xf32>
    %29 = vector.multi_reduction <maximumf>, %28, %cst_27 [1] : vector<64x64xf32> to vector<64xf32>
    %30 = vector.shape_cast %29 : vector<64xf32> to vector<64x1xf32>
    %31 = vector.broadcast %30 : vector<64x1xf32> to vector<64x64xf32>
    %32 = arith.subf %28, %31 : vector<64x64xf32>
    %33 = math.exp %32 : vector<64x64xf32>
    %cst_28 = arith.constant dense<0.000000e+00> : vector<64xf32>
    %34 = vector.multi_reduction <add>, %33, %cst_28 [1] : vector<64x64xf32> to vector<64xf32>
    %35 = vector.shape_cast %34 : vector<64xf32> to vector<64x1xf32>
    %36 = tpu.reciprocal %35 {approx = true} : vector<64x1xf32> -> vector<64x1xf32>
    %37 = vector.broadcast %36 : vector<64x1xf32> to vector<64x64xf32>
    %38 = arith.mulf %33, %37 : vector<64x64xf32>
    %cst_29 = arith.constant dense<0.000000e+00> : vector<64x16xf32>
    %39 = tpu.matmul %38, %19, %cst_29 {dimension_numbers = #tpu.dot_dimension_numbers<[1], [0], [0], [1], [0, 0, 1, 1], [], []>} : vector<64x64xf32>, vector<64x16xf32>, vector<64x16xf32> -> vector<64x16xf32>
    %c0_30 = arith.constant 0 : index
    %c0_31 = arith.constant 0 : index
    %40 = vector.load %arg15[%c0_30, %c0_31] : memref<64x16xf32, #tpu.memory_space<vmem>>, vector<64x16xf32>
    tpu.vector_store %arg15[%c0_30, %c0_31], %39 {strides = array<i32>} : memref<64x16xf32, #tpu.memory_space<vmem>>, vector<64x16xf32>,
    %c0_32 = arith.constant 0 : index
    %c0_33 = arith.constant 0 : index
    %41 = vector.load %arg15[%c0_32, %c0_33] : memref<64x16xf32, #tpu.memory_space<vmem>>, vector<64x16xf32>
    %cst_34 = arith.constant dense<0.000000e+00> : vector<64x32xf32>
    %42 = tpu.matmul %41, %7, %cst_34 {dimension_numbers = #tpu.dot_dimension_numbers<[1], [0], [0], [1], [0, 0, 1, 1], [], []>} : vector<64x16xf32>, vector<16x32xf32>, vector<64x32xf32> -> vector<64x32xf32>
    %c0_35 = arith.constant 0 : index
    %c0_36 = arith.constant 0 : index
    %43 = vector.load %arg8[%c0_35, %c0_36] : memref<16x128xf32, #tpu.memory_space<vmem>>, vector<16x128xf32>
    %cst_37 = arith.constant dense<0.000000e+00> : vector<64x128xf32>
    %44 = tpu.matmul %41, %43, %cst_37 {dimension_numbers = #tpu.dot_dimension_numbers<[1], [0], [0], [1], [0, 0, 1, 1], [], []>} : vector<64x16xf32>, vector<16x128xf32>, vector<64x128xf32> -> vector<64x128xf32>
    %c0_38 = arith.constant 0 : index
    %c0_39 = arith.constant 0 : index
    %45 = vector.load %arg9[%c0_38, %c0_39] : memref<64x128xf32, #tpu.memory_space<vmem>>, vector<64x128xf32>
    %46 = arith.mulf %44, %45 : vector<64x128xf32>
    %c0_40 = arith.constant 0 : index
    %c0_41 = arith.constant 0 : index
    %47 = vector.load %arg10[%c0_40, %c0_41] : memref<128x32xf32, #tpu.memory_space<vmem>>, vector<128x32xf32>
    %cst_42 = arith.constant dense<0.000000e+00> : vector<64x32xf32>
    %48 = tpu.matmul %46, %47, %cst_42 {dimension_numbers = #tpu.dot_dimension_numbers<[1], [0], [0], [1], [0, 0, 1, 1], [], []>} : vector<64x128xf32>, vector<128x32xf32>, vector<64x32xf32> -> vector<64x32xf32>
    %c0_43 = arith.constant 0 : index
    %c0_44 = arith.constant 0 : index
    %c0_45 = arith.constant 0 : index
    %49 = vector.load %arg11[%c0_43, %c0_44, %c0_45] : memref<2x64x32xf32, #tpu.memory_space<vmem>>, vector<1x64x32xf32>
    %50 = vector.shape_cast %49 : vector<1x64x32xf32> to vector<64x32xf32>
    %c1_46 = arith.constant 1 : index
    %c0_47 = arith.constant 0 : index
    %c0_48 = arith.constant 0 : index
    %51 = vector.load %arg11[%c1_46, %c0_47, %c0_48] : memref<2x64x32xf32, #tpu.memory_space<vmem>>, vector<1x64x32xf32>
    %52 = vector.shape_cast %51 : vector<1x64x32xf32> to vector<64x32xf32>
    %53 = arith.mulf %42, %50 : vector<64x32xf32>
    %54 = arith.mulf %48, %52 : vector<64x32xf32>
    %55 = arith.addf %53, %54 : vector<64x32xf32>
    %c0_49 = arith.constant 0 : index
    %c0_50 = arith.constant 0 : index
    %56 = vector.load %arg12[%c0_49, %c0_50] : memref<16x64xf32, #tpu.memory_space<vmem>>, vector<16x64xf32>
    %cst_51 = arith.constant dense<0.000000e+00> : vector<16x32xf32>
    %57 = tpu.matmul %56, %55, %cst_51 {dimension_numbers = #tpu.dot_dimension_numbers<[1], [0], [0], [1], [0, 0, 1, 1], [], []>} : vector<16x64xf32>, vector<64x32xf32>, vector<16x32xf32> -> vector<16x32xf32>
    %c0_52 = arith.constant 0 : index
    %c0_53 = arith.constant 0 : index
    %58 = vector.load %arg13[%c0_52, %c0_53] : memref<1x32xf32, #tpu.memory_space<vmem>>, vector<1x32xf32>
    %59 = vector.broadcast %58 : vector<1x32xf32> to vector<16x32xf32>
    %60 = arith.addf %57, %59 : vector<16x32xf32>
    %c0_54 = arith.constant 0 : index
    %c0_55 = arith.constant 0 : index
    %61 = vector.load %arg14[%c0_54, %c0_55] : memref<16x32xf32, #tpu.memory_space<vmem>>, vector<16x32xf32>
    tpu.vector_store %arg14[%c0_54, %c0_55], %60 {strides = array<i32>} : memref<16x32xf32, #tpu.memory_space<vmem>>, vector<16x32xf32>,
    return
  }
  func.func @transform_0(%arg0: i32) -> (i32, i32) {
    %c0_i32 = arith.constant 0 : i32
    %c0_i32_0 = arith.constant 0 : i32
    return %arg0, %c0_i32 : i32, i32
  }
  func.func @transform_1(%arg0: i32) -> (i32, i32) {
    %c0_i32 = arith.constant 0 : i32
    %c0_i32_0 = arith.constant 0 : i32
    %c0_i32_1 = arith.constant 0 : i32
    return %c0_i32, %c0_i32_0 : i32, i32
  }
  func.func @transform_2(%arg0: i32) -> (i32, i32) {
    %c0_i32 = arith.constant 0 : i32
    %c0_i32_0 = arith.constant 0 : i32
    %c0_i32_1 = arith.constant 0 : i32
    return %c0_i32, %c0_i32_0 : i32, i32
  }
  func.func @transform_3(%arg0: i32) -> (i32, i32) {
    %c0_i32 = arith.constant 0 : i32
    %c0_i32_0 = arith.constant 0 : i32
    %c0_i32_1 = arith.constant 0 : i32
    return %c0_i32, %c0_i32_0 : i32, i32
  }
  func.func @transform_4(%arg0: i32) -> (i32, i32, i32) {
    %c0_i32 = arith.constant 0 : i32
    %c0_i32_0 = arith.constant 0 : i32
    %c0_i32_1 = arith.constant 0 : i32
    %c0_i32_2 = arith.constant 0 : i32
    return %c0_i32, %c0_i32_0, %c0_i32_1 : i32, i32, i32
  }
  func.func @transform_5(%arg0: i32) -> (i32, i32) {
    %c0_i32 = arith.constant 0 : i32
    %c0_i32_0 = arith.constant 0 : i32
    %c0_i32_1 = arith.constant 0 : i32
    return %c0_i32, %c0_i32_0 : i32, i32
  }
  func.func @transform_6(%arg0: i32) -> (i32, i32, i32) {
    %c0_i32 = arith.constant 0 : i32
    %c0_i32_0 = arith.constant 0 : i32
    %c0_i32_1 = arith.constant 0 : i32
    %c0_i32_2 = arith.constant 0 : i32
    return %c0_i32, %c0_i32_0, %c0_i32_1 : i32, i32, i32
  }
  func.func @transform_7(%arg0: i32) -> (i32, i32) {
    %c0_i32 = arith.constant 0 : i32
    %c0_i32_0 = arith.constant 0 : i32
    %c0_i32_1 = arith.constant 0 : i32
    return %c0_i32, %c0_i32_0 : i32, i32
  }
  func.func @transform_8(%arg0: i32) -> (i32, i32) {
    %c0_i32 = arith.constant 0 : i32
    %c0_i32_0 = arith.constant 0 : i32
    %c0_i32_1 = arith.constant 0 : i32
    return %c0_i32, %c0_i32_0 : i32, i32
  }
  func.func @transform_9(%arg0: i32) -> (i32, i32) {
    %c0_i32 = arith.constant 0 : i32
    %c0_i32_0 = arith.constant 0 : i32
    %c0_i32_1 = arith.constant 0 : i32
    return %c0_i32, %c0_i32_0 : i32, i32
  }
  func.func @transform_10(%arg0: i32) -> (i32, i32, i32) {
    %c0_i32 = arith.constant 0 : i32
    %c0_i32_0 = arith.constant 0 : i32
    %c0_i32_1 = arith.constant 0 : i32
    %c0_i32_2 = arith.constant 0 : i32
    return %c0_i32, %c0_i32_0, %c0_i32_1 : i32, i32, i32
  }
  func.func @transform_11(%arg0: i32) -> (i32, i32) {
    %c0_i32 = arith.constant 0 : i32
    %c0_i32_0 = arith.constant 0 : i32
    %c0_i32_1 = arith.constant 0 : i32
    return %c0_i32, %c0_i32_0 : i32, i32
  }
  func.func @transform_12(%arg0: i32) -> (i32, i32) {
    %c0_i32 = arith.constant 0 : i32
    %c0_i32_0 = arith.constant 0 : i32
    %c0_i32_1 = arith.constant 0 : i32
    return %c0_i32, %c0_i32_0 : i32, i32
  }
  func.func @transform_13(%arg0: i32) -> (i32, i32) {
    %c0_i32 = arith.constant 0 : i32
    %c0_i32_0 = arith.constant 0 : i32
    return %arg0, %c0_i32 : i32, i32
  }
}

</mosaic_0001>

<llo_original>
// kernel: tpu_custom_call.1
$region0: #{tpu_custom_call.1}
  #allocation0 [shape = 'u32[]', space=smem, size = 0x4, offset = 0x4, fixed_abs, tag = 'smem constant byte address 0x4 - core index']
  #allocation1 [shape = 'u32[144,128]{1,0:T(1,128)}', space=vmem, size = 0x12000, scoped, tag = 'internal scratch']
  #allocation2 [shape = 'f32[64,16]{1,0:T(8,128)}', space=vmem, size = 0x8000, scoped, tag = 'scratch operand']
  %s0 = inlined_call_operand.vmem [shape: f32[32,32], index: 0, kind: input, shape index: {}]
  %s1 = inlined_call_operand.vmem [shape: f32[32,544], index: 1, kind: input, shape index: {}]
  %s2 = inlined_call_operand.vmem [shape: f32[1,544], index: 2, kind: input, shape index: {}]
  %s3 = inlined_call_operand.vmem [shape: f32[16,512], index: 3, kind: input, shape index: {}]
  %s4 = inlined_call_operand.vmem [shape: f32[3,512,64], index: 4, kind: input, shape index: {}]
  %s5 = inlined_call_operand.vmem [shape: f32[64,16], index: 5, kind: input, shape index: {}]
  %s6 = inlined_call_operand.vmem [shape: f32[2,64,64], index: 6, kind: input, shape index: {}]
  %s7 = inlined_call_operand.vmem [shape: f32[16,128], index: 7, kind: input, shape index: {}]
  %s8 = inlined_call_operand.vmem [shape: f32[64,128], index: 8, kind: input, shape index: {}]
  %s9 = inlined_call_operand.vmem [shape: f32[128,32], index: 9, kind: input, shape index: {}]
  %s10 = inlined_call_operand.vmem [shape: f32[2,64,32], index: 10, kind: input, shape index: {}]
  %s11 = inlined_call_operand.vmem [shape: f32[16,64], index: 11, kind: input, shape index: {}]
  %s12 = inlined_call_operand.vmem [shape: f32[1,32], index: 12, kind: input, shape index: {}]
  %s13 = inlined_call_operand.hbm [shape: f32[32,32], index: 13, kind: output, shape index: {}]
  %s14 = sld [smem:[#allocation0]]
  $region85: #{tpu_custom_call.1} parent=0
    _
  %s16 = ssub.s32 1, %s14
  %s17 = scalar_select 0, %s16, %s14
  $region1: #{tpu_custom_call.1} parent=0
    #allocation3 [shape = 'u8[16384]{0}', space=vmem, size = 0x4000, scoped, tag = 'output window, operand 0']
    #allocation4 [shape = 's32[2]{0}', space=sflag, size = 0x8, scoped, tag = 'scoped memory for tpu_custom_call.1']
    %18 = vsyncpa [#allocation4], 0
    %s19 = scalar_lea.sflag [#allocation4], 1
    %20 = vsyncpa %s19, 0
    loop: start=0, step=1, limit=4
    $region2: #{tpu_custom_call.1} parent=1 // loop_pre_header
      _
    $region3: #{tpu_custom_call.1} parent=1 // loop_header
      %s22 = sphi 0, %s26
      %p23 = scmp.ge.s32.totalorder %s22, 4
      %s32 = sphi 0, %s34
      %s35 = sphi 0, %s32
      %s36 = sphi 0, %s35
      %s52 = sphi 0, %s36
      %s56 = sphi 0, %s56
      %s58 = sphi 0, %s56
      %s59 = sphi 0, %s58
      %s73 = sphi 0, %s59
      %s77 = sphi 0, %s77
      %s79 = sphi 0, %s77
      %s80 = sphi 0, %s79
      %s94 = sphi 0, %s80
      %s98 = sphi 0, %s98
      %s100 = sphi 0, %s98
      %s101 = sphi 0, %s100
      %s115 = sphi 0, %s101
      %s119 = sphi 0, %s119
      %s121 = sphi 0, %s119
      %s122 = sphi 0, %s121
      %s136 = sphi 0, %s122
      %s140 = sphi 0, %s140
      %s142 = sphi 0, %s140
      %s143 = sphi 0, %s142
      %s157 = sphi 0, %s143
      %s161 = sphi 0, %s161
      %s163 = sphi 0, %s161
      %s164 = sphi 0, %s163
      %s178 = sphi 0, %s164
      %s182 = sphi 0, %s182
      %s184 = sphi 0, %s182
      %s185 = sphi 0, %s184
      %s199 = sphi 0, %s185
      %s203 = sphi 0, %s203
      %s205 = sphi 0, %s203
      %s206 = sphi 0, %s205
      %s220 = sphi 0, %s206
      %s224 = sphi 0, %s224
      %s226 = sphi 0, %s224
      %s227 = sphi 0, %s226
      %s241 = sphi 0, %s227
      %s245 = sphi 0, %s245
      %s247 = sphi 0, %s245
      %s248 = sphi 0, %s247
      %s262 = sphi 0, %s248
      %s266 = sphi 0, %s266
      %s268 = sphi 0, %s266
      %s269 = sphi 0, %s268
      %s283 = sphi 0, %s269
      %s287 = sphi 0, %s287
      %s289 = sphi 0, %s287
      %s290 = sphi 0, %s289
      %s304 = sphi 0, %s290
      %s310 = sphi 0, %s312
      %s313 = sphi 0, %s310
      %s314 = sphi 0, %s313
      %s330 = sphi 0, %s314
    $region4: #{tpu_custom_call.1} parent=1 // loop_header_branch
      %25 = sbr.rel (%p23) target = $region8
    $region5: #{tpu_custom_call.1} parent=1 // loop_body
      %s27 = ssub.s32 %s22, 1
      %s28 = ssub.s32 %s22, 2
      %s29 = sadd.s32 %s22, 1
      %s30 = ssub.s32 %s22, %s29
      %p31 = scmp.eq.s32.totalorder %s30, 0
      %s33 = sadd.s32 %s32, 1
      %s34 = scalar_select %p31, %s32, %s33
      %p37 = pneg %p31
      %p38 = scmp.eq.s32.totalorder %s22, 1
      %p39 = por %p37, %p38
      %p40 = scmp.ne.s32.totalorder %s32, %s35
      %p41 = scmp.eq.s32.totalorder %s22, 0
      %p42 = por %p40, %p41
      %p43 = scmp.ne.s32.totalorder %s32, %s35
      %p44 = scmp.eq.s32.totalorder %s27, 1
      %p45 = por %p43, %p44
      %p46 = scmp.ne.s32.totalorder %s35, %s36
      %p47 = scmp.eq.s32.totalorder %s27, 0
      %p48 = por %p46, %p47
      %p49 = scmp.ne.s32.totalorder %s35, %s36
      %p50 = scmp.eq.s32.totalorder %s28, 1
      %p51 = por %p49, %p50
      %p53 = scmp.ne.s32.totalorder %s36, %s52
      %p54 = scmp.eq.s32.totalorder %s28, 0
      %p55 = por %p53, %p54
      %s57 = sadd.s32 %s56, 1
      %p60 = scmp.eq.s32.totalorder %s22, 1
      %p61 = scmp.ne.s32.totalorder %s56, %s58
      %p62 = scmp.eq.s32.totalorder %s22, 0
      %p63 = por %p61, %p62
      %p64 = scmp.ne.s32.totalorder %s56, %s58
      %p65 = scmp.eq.s32.totalorder %s27, 1
      %p66 = por %p64, %p65
      %p67 = scmp.ne.s32.totalorder %s58, %s59
      %p68 = scmp.eq.s32.totalorder %s27, 0
      %p69 = por %p67, %p68
      %p70 = scmp.ne.s32.totalorder %s58, %s59
      %p71 = scmp.eq.s32.totalorder %s28, 1
      %p72 = por %p70, %p71
      %p74 = scmp.ne.s32.totalorder %s59, %s73
      %p75 = scmp.eq.s32.totalorder %s28, 0
      %p76 = por %p74, %p75
      %s78 = sadd.s32 %s77, 1
      %p81 = scmp.eq.s32.totalorder %s22, 1
      %p82 = scmp.ne.s32.totalorder %s77, %s79
      %p83 = scmp.eq.s32.totalorder %s22, 0
      %p84 = por %p82, %p83
      %p85 = scmp.ne.s32.totalorder %s77, %s79
      %p86 = scmp.eq.s32.totalorder %s27, 1
      %p87 = por %p85, %p86
      %p88 = scmp.ne.s32.totalorder %s79, %s80
      %p89 = scmp.eq.s32.totalorder %s27, 0
      %p90 = por %p88, %p89
      %p91 = scmp.ne.s32.totalorder %s79, %s80
      %p92 = scmp.eq.s32.totalorder %s28, 1
      %p93 = por %p91, %p92
      %p95 = scmp.ne.s32.totalorder %s80, %s94
      %p96 = scmp.eq.s32.totalorder %s28, 0
      %p97 = por %p95, %p96
      %s99 = sadd.s32 %s98, 1
      %p102 = scmp.eq.s32.totalorder %s22, 1
      %p103 = scmp.ne.s32.totalorder %s98, %s100
      %p104 = scmp.eq.s32.totalorder %s22, 0
      %p105 = por %p103, %p104
      %p106 = scmp.ne.s32.totalorder %s98, %s100
      %p107 = scmp.eq.s32.totalorder %s27, 1
      %p108 = por %p106, %p107
      %p109 = scmp.ne.s32.totalorder %s100, %s101
      %p110 = scmp.eq.s32.totalorder %s27, 0
      %p111 = por %p109, %p110
      %p112 = scmp.ne.s32.totalorder %s100, %s101
      %p113 = scmp.eq.s32.totalorder %s28, 1
      %p114 = por %p112, %p113
      %p116 = scmp.ne.s32.totalorder %s101, %s115
      %p117 = scmp.eq.s32.totalorder %s28, 0
      %p118 = por %p116, %p117
      %s120 = sadd.s32 %s119, 1
      %p123 = scmp.eq.s32.totalorder %s22, 1
      %p124 = scmp.ne.s32.totalorder %s119, %s121
      %p125 = scmp.eq.s32.totalorder %s22, 0
      %p126 = por %p124, %p125
      %p127 = scmp.ne.s32.totalorder %s119, %s121
      %p128 = scmp.eq.s32.totalorder %s27, 1
      %p129 = por %p127, %p128
      %p130 = scmp.ne.s32.totalorder %s121, %s122
      %p131 = scmp.eq.s32.totalorder %s27, 0
      %p132 = por %p130, %p131
      %p133 = scmp.ne.s32.totalorder %s121, %s122
      %p134 = scmp.eq.s32.totalorder %s28, 1
      %p135 = por %p133, %p134
      %p137 = scmp.ne.s32.totalorder %s122, %s136
      %p138 = scmp.eq.s32.totalorder %s28, 0
      %p139 = por %p137, %p138
      %s141 = sadd.s32 %s140, 1
      %p144 = scmp.eq.s32.totalorder %s22, 1
      %p145 = scmp.ne.s32.totalorder %s140, %s142
      %p146 = scmp.eq.s32.totalorder %s22, 0
      %p147 = por %p145, %p146
      %p148 = scmp.ne.s32.totalorder %s140, %s142
      %p149 = scmp.eq.s32.totalorder %s27, 1
      %p150 = por %p148, %p149
      %p151 = scmp.ne.s32.totalorder %s142, %s143
      %p152 = scmp.eq.s32.totalorder %s27, 0
      %p153 = por %p151, %p152
      %p154 = scmp.ne.s32.totalorder %s142, %s143
      %p155 = scmp.eq.s32.totalorder %s28, 1
      %p156 = por %p154, %p155
      %p158 = scmp.ne.s32.totalorder %s143, %s157
      %p159 = scmp.eq.s32.totalorder %s28, 0
      %p160 = por %p158, %p159
      %s162 = sadd.s32 %s161, 1
      %p165 = scmp.eq.s32.totalorder %s22, 1
      %p166 = scmp.ne.s32.totalorder %s161, %s163
      %p167 = scmp.eq.s32.totalorder %s22, 0
      %p168 = por %p166, %p167
      %p169 = scmp.ne.s32.totalorder %s161, %s163
      %p170 = scmp.eq.s32.totalorder %s27, 1
      %p171 = por %p169, %p170
      %p172 = scmp.ne.s32.totalorder %s163, %s164
      %p173 = scmp.eq.s32.totalorder %s27, 0
      %p174 = por %p172, %p173
      %p175 = scmp.ne.s32.totalorder %s163, %s164
      %p176 = scmp.eq.s32.totalorder %s28, 1
      %p177 = por %p175, %p176
      %p179 = scmp.ne.s32.totalorder %s164, %s178
      %p180 = scmp.eq.s32.totalorder %s28, 0
      %p181 = por %p179, %p180
      %s183 = sadd.s32 %s182, 1
      %p186 = scmp.eq.s32.totalorder %s22, 1
      %p187 = scmp.ne.s32.totalorder %s182, %s184
      %p188 = scmp.eq.s32.totalorder %s22, 0
      %p189 = por %p187, %p188
      %p190 = scmp.ne.s32.totalorder %s182, %s184
      %p191 = scmp.eq.s32.totalorder %s27, 1
      %p192 = por %p190, %p191
      %p193 = scmp.ne.s32.totalorder %s184, %s185
      %p194 = scmp.eq.s32.totalorder %s27, 0
      %p195 = por %p193, %p194
      %p196 = scmp.ne.s32.totalorder %s184, %s185
      %p197 = scmp.eq.s32.totalorder %s28, 1
      %p198 = por %p196, %p197
      %p200 = scmp.ne.s32.totalorder %s185, %s199
      %p201 = scmp.eq.s32.totalorder %s28, 0
      %p202 = por %p200, %p201
      %s204 = sadd.s32 %s203, 1
      %p207 = scmp.eq.s32.totalorder %s22, 1
      %p208 = scmp.ne.s32.totalorder %s203, %s205
      %p209 = scmp.eq.s32.totalorder %s22, 0
      %p210 = por %p208, %p209
      %p211 = scmp.ne.s32.totalorder %s203, %s205
      %p212 = scmp.eq.s32.totalorder %s27, 1
      %p213 = por %p211, %p212
      %p214 = scmp.ne.s32.totalorder %s205, %s206
      %p215 = scmp.eq.s32.totalorder %s27, 0
      %p216 = por %p214, %p215
      %p217 = scmp.ne.s32.totalorder %s205, %s206
      %p218 = scmp.eq.s32.totalorder %s28, 1
      %p219 = por %p217, %p218
      %p221 = scmp.ne.s32.totalorder %s206, %s220
      %p222 = scmp.eq.s32.totalorder %s28, 0
      %p223 = por %p221, %p222
      %s225 = sadd.s32 %s224, 1
      %p228 = scmp.eq.s32.totalorder %s22, 1
      %p229 = scmp.ne.s32.totalorder %s224, %s226
      %p230 = scmp.eq.s32.totalorder %s22, 0
      %p231 = por %p229, %p230
      %p232 = scmp.ne.s32.totalorder %s224, %s226
      %p233 = scmp.eq.s32.totalorder %s27, 1
      %p234 = por %p232, %p233
      %p235 = scmp.ne.s32.totalorder %s226, %s227
      %p236 = scmp.eq.s32.totalorder %s27, 0
      %p237 = por %p235, %p236
      %p238 = scmp.ne.s32.totalorder %s226, %s227
      %p239 = scmp.eq.s32.totalorder %s28, 1
      %p240 = por %p238, %p239
      %p242 = scmp.ne.s32.totalorder %s227, %s241
      %p243 = scmp.eq.s32.totalorder %s28, 0
      %p244 = por %p242, %p243
      %s246 = sadd.s32 %s245, 1
      %p249 = scmp.eq.s32.totalorder %s22, 1
      %p250 = scmp.ne.s32.totalorder %s245, %s247
      %p251 = scmp.eq.s32.totalorder %s22, 0
      %p252 = por %p250, %p251
      %p253 = scmp.ne.s32.totalorder %s245, %s247
      %p254 = scmp.eq.s32.totalorder %s27, 1
      %p255 = por %p253, %p254
      %p256 = scmp.ne.s32.totalorder %s247, %s248
      %p257 = scmp.eq.s32.totalorder %s27, 0
      %p258 = por %p256, %p257
      %p259 = scmp.ne.s32.totalorder %s247, %s248
      %p260 = scmp.eq.s32.totalorder %s28, 1
      %p261 = por %p259, %p260
      %p263 = scmp.ne.s32.totalorder %s248, %s262
      %p264 = scmp.eq.s32.totalorder %s28, 0
      %p265 = por %p263, %p264
      %s267 = sadd.s32 %s266, 1
      %p270 = scmp.eq.s32.totalorder %s22, 1
      %p271 = scmp.ne.s32.totalorder %s266, %s268
      %p272 = scmp.eq.s32.totalorder %s22, 0
      %p273 = por %p271, %p272
      %p274 = scmp.ne.s32.totalorder %s266, %s268
      %p275 = scmp.eq.s32.totalorder %s27, 1
      %p276 = por %p274, %p275
      %p277 = scmp.ne.s32.totalorder %s268, %s269
      %p278 = scmp.eq.s32.totalorder %s27, 0
      %p279 = por %p277, %p278
      %p280 = scmp.ne.s32.totalorder %s268, %s269
      %p281 = scmp.eq.s32.totalorder %s28, 1
      %p282 = por %p280, %p281
      %p284 = scmp.ne.s32.totalorder %s269, %s283
      %p285 = scmp.eq.s32.totalorder %s28, 0
      %p286 = por %p284, %p285
      %s288 = sadd.s32 %s287, 1
      %p291 = scmp.eq.s32.totalorder %s22, 1
      %p292 = scmp.ne.s32.totalorder %s287, %s289
      %p293 = scmp.eq.s32.totalorder %s22, 0
      %p294 = por %p292, %p293
      %p295 = scmp.ne.s32.totalorder %s287, %s289
      %p296 = scmp.eq.s32.totalorder %s27, 1
      %p297 = por %p295, %p296
      %p298 = scmp.ne.s32.totalorder %s289, %s290
      %p299 = scmp.eq.s32.totalorder %s27, 0
      %p300 = por %p298, %p299
      %p301 = scmp.ne.s32.totalorder %s289, %s290
      %p302 = scmp.eq.s32.totalorder %s28, 1
      %p303 = por %p301, %p302
      %p305 = scmp.ne.s32.totalorder %s290, %s304
      %p306 = scmp.eq.s32.totalorder %s28, 0
      %p307 = por %p305, %p306
      %s308 = ssub.s32 %s22, %s29
      %p309 = scmp.eq.s32.totalorder %s308, 0
      %s311 = sadd.s32 %s310, 1
      %s312 = scalar_select %p309, %s310, %s311
      %p315 = pneg %p309
      %p316 = scmp.eq.s32.totalorder %s22, 1
      %p317 = por %p315, %p316
      %p318 = scmp.ne.s32.totalorder %s310, %s313
      %p319 = scmp.eq.s32.totalorder %s22, 0
      %p320 = por %p318, %p319
      %p321 = scmp.ne.s32.totalorder %s310, %s313
      %p322 = scmp.eq.s32.totalorder %s27, 1
      %p323 = por %p321, %p322
      %p324 = scmp.ne.s32.totalorder %s313, %s314
      %p325 = scmp.eq.s32.totalorder %s27, 0
      %p326 = por %p324, %p325
      %p327 = scmp.ne.s32.totalorder %s313, %s314
      %p328 = scmp.eq.s32.totalorder %s28, 1
      %p329 = por %p327, %p328
      %p331 = scmp.ne.s32.totalorder %s314, %s330
      %p332 = scmp.eq.s32.totalorder %s28, 0
      %p333 = por %p331, %p332
      %p334 = scmp.le.s32.totalorder 1, %s22
      %p335 = scmp.lt.s32.totalorder %s22, 3
      %p336 = pnand %p334, %p335
      %p337 = pneg %p336
      // Predicated region
      $region9: #{tpu_custom_call.1} parent=5 // pred_check
        _
      $region10: #{tpu_custom_call.1} parent=5 // pred_check_branch
        %339 = sbr.rel (%p336) target = $region12
      $region11: #{tpu_custom_call.1} parent=5 // pred_region
        %s340 = ssub.s32 %s22, 1
        // Predicated region
        $region13: #{tpu_custom_call.1} parent=11 // pred_check
          %p341 = pneg %p69
        $region14: #{tpu_custom_call.1} parent=11 // pred_check_branch
          %343 = sbr.rel (%p341) target = $region16
        $region15: #{tpu_custom_call.1} parent=11 // pred_region
          _
        $region16: #{tpu_custom_call.1} parent=11 // pred_fallthru
          _
        // Predicated region
        $region17: #{tpu_custom_call.1} parent=11 // pred_check
          %p344 = pneg %p90
        $region18: #{tpu_custom_call.1} parent=11 // pred_check_branch
          %346 = sbr.rel (%p344) target = $region20
        $region19: #{tpu_custom_call.1} parent=11 // pred_region
          _
        $region20: #{tpu_custom_call.1} parent=11 // pred_fallthru
          _
        // Predicated region
        $region21: #{tpu_custom_call.1} parent=11 // pred_check
          %p347 = pneg %p111
        $region22: #{tpu_custom_call.1} parent=11 // pred_check_branch
          %349 = sbr.rel (%p347) target = $region24
        $region23: #{tpu_custom_call.1} parent=11 // pred_region
          _
        $region24: #{tpu_custom_call.1} parent=11 // pred_fallthru
          _
        // Predicated region
        $region25: #{tpu_custom_call.1} parent=11 // pred_check
          %p350 = pneg %p132
        $region26: #{tpu_custom_call.1} parent=11 // pred_check_branch
          %352 = sbr.rel (%p350) target = $region28
        $region27: #{tpu_custom_call.1} parent=11 // pred_region
          _
        $region28: #{tpu_custom_call.1} parent=11 // pred_fallthru
          _
        // Predicated region
        $region29: #{tpu_custom_call.1} parent=11 // pred_check
          %p353 = pneg %p153
        $region30: #{tpu_custom_call.1} parent=11 // pred_check_branch
          %355 = sbr.rel (%p353) target = $region32
        $region31: #{tpu_custom_call.1} parent=11 // pred_region
          _
        $region32: #{tpu_custom_call.1} parent=11 // pred_fallthru
          _
        // Predicated region
        $region33: #{tpu_custom_call.1} parent=11 // pred_check
          %p356 = pneg %p174
        $region34: #{tpu_custom_call.1} parent=11 // pred_check_branch
          %358 = sbr.rel (%p356) target = $region36
        $region35: #{tpu_custom_call.1} parent=11 // pred_region
          _
        $region36: #{tpu_custom_call.1} parent=11 // pred_fallthru
          _
        // Predicated region
        $region37: #{tpu_custom_call.1} parent=11 // pred_check
          %p359 = pneg %p195
        $region38: #{tpu_custom_call.1} parent=11 // pred_check_branch
          %361 = sbr.rel (%p359) target = $region40
        $region39: #{tpu_custom_call.1} parent=11 // pred_region
          _
        $region40: #{tpu_custom_call.1} parent=11 // pred_fallthru
          _
        // Predicated region
        $region41: #{tpu_custom_call.1} parent=11 // pred_check
          %p362 = pneg %p216
        $region42: #{tpu_custom_call.1} parent=11 // pred_check_branch
          %364 = sbr.rel (%p362) target = $region44
        $region43: #{tpu_custom_call.1} parent=11 // pred_region
          _
        $region44: #{tpu_custom_call.1} parent=11 // pred_fallthru
          _
        // Predicated region
        $region45: #{tpu_custom_call.1} parent=11 // pred_check
          %p365 = pneg %p237
        $region46: #{tpu_custom_call.1} parent=11 // pred_check_branch
          %367 = sbr.rel (%p365) target = $region48
        $region47: #{tpu_custom_call.1} parent=11 // pred_region
          _
        $region48: #{tpu_custom_call.1} parent=11 // pred_fallthru
          _
        // Predicated region
        $region49: #{tpu_custom_call.1} parent=11 // pred_check
          %p368 = pneg %p258
        $region50: #{tpu_custom_call.1} parent=11 // pred_check_branch
          %370 = sbr.rel (%p368) target = $region52
        $region51: #{tpu_custom_call.1} parent=11 // pred_region
          _
        $region52: #{tpu_custom_call.1} parent=11 // pred_fallthru
          _
        // Predicated region
        $region53: #{tpu_custom_call.1} parent=11 // pred_check
          %p371 = pneg %p279
        $region54: #{tpu_custom_call.1} parent=11 // pred_check_branch
          %373 = sbr.rel (%p371) target = $region56
        $region55: #{tpu_custom_call.1} parent=11 // pred_region
          _
        $region56: #{tpu_custom_call.1} parent=11 // pred_fallthru
          _
        // Predicated region
        $region57: #{tpu_custom_call.1} parent=11 // pred_check
          %p374 = pneg %p300
        $region58: #{tpu_custom_call.1} parent=11 // pred_check_branch
          %376 = sbr.rel (%p374) target = $region60
        $region59: #{tpu_custom_call.1} parent=11 // pred_region
          _
        $region60: #{tpu_custom_call.1} parent=11 // pred_fallthru
          _
      $region12: #{tpu_custom_call.1} parent=5 // pred_fallthru
        _
      %p377 = scmp.lt.s32.totalorder %s22, 2
      // Predicated region
      $region61: #{tpu_custom_call.1} parent=5 // pred_check
        %p378 = pneg %p377
      $region62: #{tpu_custom_call.1} parent=5 // pred_check_branch
        %380 = sbr.rel (%p378) target = $region64
      $region63: #{tpu_custom_call.1} parent=5 // pred_region
        // Predicated region
        $region65: #{tpu_custom_call.1} parent=63 // pred_check
          %p381 = pneg %p42
        $region66: #{tpu_custom_call.1} parent=63 // pred_check_branch
          %383 = sbr.rel (%p381) target = $region68
        $region67: #{tpu_custom_call.1} parent=63 // pred_region
          %s384 = smul.u32 2, %s22
          %p385 = scmp.lt.s32.totalorder %s384, 3
          %s386 = scalar_select %p385, %s384, 3
          %s387 = smul.addr %s386, 8
          %s388 = scalar_lea.vmem %s0, %s387
          %s389 = smul.u32 2, %s22
        $region68: #{tpu_custom_call.1} parent=63 // pred_fallthru
          _
      $region64: #{tpu_custom_call.1} parent=5 // pred_fallthru
        _
      %p390 = scmp.le.s32.totalorder 1, %s22
      %p391 = scmp.lt.s32.totalorder %s22, 3
      %p392 = pnand %p390, %p391
      %p393 = pneg %p392
      // Predicated region
      $region69: #{tpu_custom_call.1} parent=5 // pred_check
        _
      $region70: #{tpu_custom_call.1} parent=5 // pred_check_branch
        %395 = sbr.rel (%p392) target = $region72
      $region71: #{tpu_custom_call.1} parent=5 // pred_region
        %s396 = ssub.s32 %s22, 1
        %s397 = smul.u32 2, %s27
        %p398 = scmp.lt.s32.totalorder %s397, 3
        %s399 = scalar_select %p398, %s397, 3
        %s400 = smul.addr %s399, 8
        %s401 = scalar_lea.vmem %s0, %s400
        %p402 = pneg %p48
        %p403 = pneg %p45
        %p404 = pneg %p69
        %p405 = pneg %p66
        %p406 = pneg %p90
        %p407 = pneg %p87
        %p408 = pneg %p111
        %p409 = pneg %p108
        %p410 = pneg %p132
        %p411 = pneg %p129
        %p412 = pneg %p153
        %p413 = pneg %p150
        %p414 = pneg %p174
        %p415 = pneg %p171
        %p416 = pneg %p195
        %p417 = pneg %p192
        %p418 = pneg %p216
        %p419 = pneg %p213
        %p420 = pneg %p237
        %p421 = pneg %p234
        %p422 = pneg %p258
        %p423 = pneg %p255
        %p424 = pneg %p279
        %p425 = pneg %p276
        %p426 = pneg %p300
        %p427 = pneg %p297
        %p428 = pneg %p326
        %p429 = pneg %p323
        %s430 = sand.u32 %s313, 1
        %s431 = scalar_lea.sflag [#allocation4], %s430
        %s432 = sand.u32 %s313, 1
        %s433 = smul.addr %s432, 16
        %s434 = scalar_lea.vmem [#allocation3], %s433
        %s435 = smul.u32 2, %s27
        %p436 = scmp.lt.s32.totalorder %s435, 3
        %s437 = scalar_select %p436, %s435, 3
        %s438 = smul.addr %s437, 8
        %s439 = scalar_lea.vmem %s0, %s438
        %s440 = smul.u32 2, %s27
        %s441 = smul.u32 2, %s27
        %v442 = vld [vmem:[%s439] sm:$0xff]
        %v443 = vld [vmem:[%s439 + $0x8] sm:$0xff]
        %v444 = vld [vmem:[%s1] sm:$0xff]
        %v445 = vld [vmem:[%s1 + $0x8] sm:$0xff]
        %v446 = vld [vmem:[%s1 + $0x10] sm:$0xff]
        %v447 = vld [vmem:[%s1 + $0x18] sm:$0xff]
        %v448 = vld [vmem:[%s1 + $0x20] sm:$0xff]
        %v449 = vld [vmem:[%s1 + $0x28] sm:$0xff]
        %v450 = vld [vmem:[%s1 + $0x30] sm:$0xff]
        %v451 = vld [vmem:[%s1 + $0x38] sm:$0xff]
        %v452 = vld [vmem:[%s1 + $0x40] sm:$0xff]
        %v453 = vld [vmem:[%s1 + $0x48] sm:$0xff]
        %v454 = vld [vmem:[%s1 + $0x50] sm:$0xff]
        %v455 = vld [vmem:[%s1 + $0x58] sm:$0xff]
        %v456 = vld [vmem:[%s1 + $0x60] sm:$0xff]
        %v457 = vld [vmem:[%s1 + $0x68] sm:$0xff]
        %v458 = vld [vmem:[%s1 + $0x70] sm:$0xff]
        %v459 = vld [vmem:[%s1 + $0x78] sm:$0xff]
        %v460 = vld [vmem:[%s1 + $0x80] sm:$0xff]
        %v461 = vld [vmem:[%s1 + $0x88] sm:$0xff]
        %v462 = vld [vmem:[%s1 + $0x90] sm:$0xff]
        %v463 = vld [vmem:[%s1 + $0x98] sm:$0xff]
        %v464 = vld [vmem:[%s2] sm:$0x1f]
        %v466 = vlaneseq
        %v467 = vshrl.u32 %v466, 7
        %v468 = vsub.s32 0, %v467
        %v469 = vrot.slane %v464, %v468
        %v470 = vlaneseq
        %v471 = vshrl.u32 %v470, 7
        %v472 = vsub.s32 1, %v471
        %v473 = vrot.slane %v464, %v472
        %v474 = vlaneseq
        %v475 = vshrl.u32 %v474, 7
        %v476 = vsub.s32 2, %v475
        %v477 = vrot.slane %v464, %v476
        %v478 = vlaneseq
        %v479 = vshrl.u32 %v478, 7
        %v480 = vsub.s32 3, %v479
        %v481 = vrot.slane %v464, %v480
        %v482 = vlaneseq
        %v483 = vshrl.u32 %v482, 7
        %v484 = vsub.s32 4, %v483
        %v485 = vrot.slane %v464, %v484
        %vm491 = vcmask 261120
        %v493 = vsel %vm491, %v442, 0
        %v496 = vsel %vm491, %v443, 0
        %498 = vmatprep.subr.mxu0 %v445
        %499 = vmatpush1.msra.mxu0 %v444
        %500 = vmatprep.subr.mxu0 %v450
        %501 = vmatpush1.msra.mxu0 %v449
        %502 = vmatprep.subr.mxu0 %v455
        %503 = vmatpush1.msra.mxu0 %v454
        %504 = vmatprep.subr.mxu0 %v460
        %505 = vmatpush1.msra.mxu0 %v459
        %506 = vmatprep.subr.mxu0 0.0
        %507 = vmatpush1.msra.mxu0 0.0
        %508 = vmatprep.subr.mxu0 0.0
        %509 = vmatpush1.msra.mxu0 0.0
        %510 = vmatprep.subr.mxu0 0.0
        %511 = vmatpush1.msra.mxu0 0.0
        %512 = vmatprep.subr.mxu0 0.0
        %513 = vmatpush1.msra.mxu0 0.0
        %514 = vmatprep.subr.mxu0 0.0
        %515 = vmatpush1.msra.mxu0 0.0
        %516 = vmatprep.subr.mxu0 0.0
        %517 = vmatpush1.msra.mxu0 0.0
        %518 = vmatprep.subr.mxu0 0.0
        %519 = vmatpush1.msra.mxu0 0.0
        %520 = vmatprep.subr.mxu0 0.0
        %521 = vmatpush1.msra.mxu0 0.0
        %522 = vmatprep.subr.mxu0 0.0
        %523 = vmatpush1.msra.mxu0 0.0
        %524 = vmatprep.subr.mxu0 0.0
        %525 = vmatpush1.msra.mxu0 0.0
        %526 = vmatprep.subr.mxu0 0.0
        %527 = vmatpush1.msra.mxu0 0.0
        %528 = vmatprep.subr.mxu0 0.0
        %529 = vmatpush1.msra.mxu0 0.0
        %530 = vmatprep.subr.mxu0 0.0
        %531 = vmatpush1.msra.mxu0 0.0
        %532 = vmatprep.subr.mxu0 0.0
        %533 = vmatpush1.msra.mxu0 0.0
        %534 = vmatprep.subr.mxu0 0.0
        %535 = vmatpush1.msra.mxu0 0.0
        %536 = vmatprep.subr.mxu0 0.0
        %537 = vmatpush1.msra.mxu0 0.0
        %538 = vmatprep.subr.mxu0 0.0
        %539 = vmatpush1.msra.mxu0 0.0
        %540 = vmatprep.subr.mxu0 0.0
        %541 = vmatpush1.msra.mxu0 0.0
        %542 = vmatprep.subr.mxu0 0.0
        %543 = vmatpush1.msra.mxu0 0.0
        %544 = vmatprep.subr.mxu0 0.0
        %545 = vmatpush1.msra.mxu0 0.0
        %546 = vmatprep.subr.mxu0 0.0
        %547 = vmatpush1.msra.mxu0 0.0
        %548 = vmatprep.subr.mxu0 0.0
        %549 = vmatpush1.msra.mxu0 0.0
        %550 = vmatprep.subr.mxu0 0.0
        %551 = vmatpush1.msra.mxu0 0.0
        %552 = vmatprep.subr.mxu0 0.0
        %553 = vmatpush1.msra.mxu0 0.0
        %554 = vmatprep.subr.mxu0 0.0
        %555 = vmatpush1.msra.mxu0 0.0
        %556 = vmatprep.subr.mxu0 0.0
        %557 = vmatpush1.msra.mxu0 0.0
        %558 = vmatprep.subr.mxu0 0.0
        %559 = vmatpush1.msra.mxu0 0.0
        %560 = vmatprep.subr.mxu0 0.0
        %561 = vmatpush1.msra.mxu0 0.0
        %562 = vmatprep.mubr.f32.mxu0 0.0
        %563 = vmatmul.mubr.f32.gmra.mrb[0].mxu0 %v493
        %v564 = vpop.f32.mrb[0].mxu0
        %v565 = vadd.f32 %v469, %v564
        %v566 = vpop.f32.mrb[0].mxu0
        %v567 = vadd.f32 %v473, %v566
        %568 = vmatprep.mubr.f32.mxu0 0.0
        %569 = vmatmul.mubr.f32.gmra.mrb[0].mxu0 %v496
        %v570 = vpop.f32.mrb[0].mxu0
        %v571 = vadd.f32 %v469, %v570
        %v572 = vpop.f32.mrb[0].mxu0
        %v573 = vadd.f32 %v473, %v572
        %574 = vdwg.mxu0
        %575 = vmatprep.subr.mxu0 %v447
        %576 = vmatpush1.msra.mxu0 %v446
        %577 = vmatprep.subr.mxu0 %v452
        %578 = vmatpush1.msra.mxu0 %v451
        %579 = vmatprep.subr.mxu0 %v457
        %580 = vmatpush1.msra.mxu0 %v456
        %581 = vmatprep.subr.mxu0 %v462
        %582 = vmatpush1.msra.mxu0 %v461
        %583 = vmatprep.subr.mxu0 0.0
        %584 = vmatpush1.msra.mxu0 0.0
        %585 = vmatprep.subr.mxu0 0.0
        %586 = vmatpush1.msra.mxu0 0.0
        %587 = vmatprep.subr.mxu0 0.0
        %588 = vmatpush1.msra.mxu0 0.0
        %589 = vmatprep.subr.mxu0 0.0
        %590 = vmatpush1.msra.mxu0 0.0
        %591 = vmatprep.subr.mxu0 0.0
        %592 = vmatpush1.msra.mxu0 0.0
        %593 = vmatprep.subr.mxu0 0.0
        %594 = vmatpush1.msra.mxu0 0.0
        %595 = vmatprep.subr.mxu0 0.0
        %596 = vmatpush1.msra.mxu0 0.0
        %597 = vmatprep.subr.mxu0 0.0
        %598 = vmatpush1.msra.mxu0 0.0
        %599 = vmatprep.subr.mxu0 0.0
        %600 = vmatpush1.msra.mxu0 0.0
        %601 = vmatprep.subr.mxu0 0.0
        %602 = vmatpush1.msra.mxu0 0.0
        %603 = vmatprep.subr.mxu0 0.0
        %604 = vmatpush1.msra.mxu0 0.0
        %605 = vmatprep.subr.mxu0 0.0
        %606 = vmatpush1.msra.mxu0 0.0
        %607 = vmatprep.subr.mxu0 0.0
        %608 = vmatpush1.msra.mxu0 0.0
        %609 = vmatprep.subr.mxu0 0.0
        %610 = vmatpush1.msra.mxu0 0.0
        %611 = vmatprep.subr.mxu0 0.0
        %612 = vmatpush1.msra.mxu0 0.0
        %613 = vmatprep.subr.mxu0 0.0
        %614 = vmatpush1.msra.mxu0 0.0
        %615 = vmatprep.subr.mxu0 0.0
        %616 = vmatpush1.msra.mxu0 0.0
        %617 = vmatprep.subr.mxu0 0.0
        %618 = vmatpush1.msra.mxu0 0.0
        %619 = vmatprep.subr.mxu0 0.0
        %620 = vmatpush1.msra.mxu0 0.0
        %621 = vmatprep.subr.mxu0 0.0
        %622 = vmatpush1.msra.mxu0 0.0
        %623 = vmatprep.subr.mxu0 0.0
        %624 = vmatpush1.msra.mxu0 0.0
        %625 = vmatprep.subr.mxu0 0.0
        %626 = vmatpush1.msra.mxu0 0.0
        %627 = vmatprep.subr.mxu0 0.0
        %628 = vmatpush1.msra.mxu0 0.0
        %629 = vmatprep.subr.mxu0 0.0
        %630 = vmatpush1.msra.mxu0 0.0
        %631 = vmatprep.subr.mxu0 0.0
        %632 = vmatpush1.msra.mxu0 0.0
        %633 = vmatprep.subr.mxu0 0.0
        %634 = vmatpush1.msra.mxu0 0.0
        %635 = vmatprep.subr.mxu0 0.0
        %636 = vmatpush1.msra.mxu0 0.0
        %637 = vmatprep.subr.mxu0 0.0
        %638 = vmatpush1.msra.mxu0 0.0
        %639 = vmatprep.mubr.f32.mxu0 0.0
        %640 = vmatmul.mubr.f32.gmra.mrb[0].mxu0 %v493
        %v641 = vpop.f32.mrb[0].mxu0
        %v642 = vadd.f32 %v477, %v641
        %v643 = vpop.f32.mrb[0].mxu0
        %v644 = vadd.f32 %v481, %v643
        %645 = vmatprep.mubr.f32.mxu0 0.0
        %646 = vmatmul.mubr.f32.gmra.mrb[0].mxu0 %v496
        %v647 = vpop.f32.mrb[0].mxu0
        %v648 = vadd.f32 %v477, %v647
        %v649 = vpop.f32.mrb[0].mxu0
        %v650 = vadd.f32 %v481, %v649
        %651 = vdwg.mxu0
        %652 = vmatprep.subr.mxu0 0.0
        %653 = vmatpush1.msra.mxu0 %v448
        %654 = vmatprep.subr.mxu0 0.0
        %655 = vmatpush1.msra.mxu0 %v453
        %656 = vmatprep.subr.mxu0 0.0
        %657 = vmatpush1.msra.mxu0 %v458
        %658 = vmatprep.subr.mxu0 0.0
        %659 = vmatpush1.msra.mxu0 %v463
        %660 = vmatprep.subr.mxu0 0.0
        %661 = vmatpush1.msra.mxu0 0.0
        %662 = vmatprep.subr.mxu0 0.0
        %663 = vmatpush1.msra.mxu0 0.0
        %664 = vmatprep.subr.mxu0 0.0
        %665 = vmatpush1.msra.mxu0 0.0
        %666 = vmatprep.subr.mxu0 0.0
        %667 = vmatpush1.msra.mxu0 0.0
        %668 = vmatprep.subr.mxu0 0.0
        %669 = vmatpush1.msra.mxu0 0.0
        %670 = vmatprep.subr.mxu0 0.0
        %671 = vmatpush1.msra.mxu0 0.0
        %672 = vmatprep.subr.mxu0 0.0
        %673 = vmatpush1.msra.mxu0 0.0
        %674 = vmatprep.subr.mxu0 0.0
        %675 = vmatpush1.msra.mxu0 0.0
        %676 = vmatprep.subr.mxu0 0.0
        %677 = vmatpush1.msra.mxu0 0.0
        %678 = vmatprep.subr.mxu0 0.0
        %679 = vmatpush1.msra.mxu0 0.0
        %680 = vmatprep.subr.mxu0 0.0
        %681 = vmatpush1.msra.mxu0 0.0
        %682 = vmatprep.subr.mxu0 0.0
        %683 = vmatpush1.msra.mxu0 0.0
        %684 = vmatprep.subr.mxu0 0.0
        %685 = vmatpush1.msra.mxu0 0.0
        %686 = vmatprep.subr.mxu0 0.0
        %687 = vmatpush1.msra.mxu0 0.0
        %688 = vmatprep.subr.mxu0 0.0
        %689 = vmatpush1.msra.mxu0 0.0
        %690 = vmatprep.subr.mxu0 0.0
        %691 = vmatpush1.msra.mxu0 0.0
        %692 = vmatprep.subr.mxu0 0.0
        %693 = vmatpush1.msra.mxu0 0.0
        %694 = vmatprep.subr.mxu0 0.0
        %695 = vmatpush1.msra.mxu0 0.0
        %696 = vmatprep.subr.mxu0 0.0
        %697 = vmatpush1.msra.mxu0 0.0
        %698 = vmatprep.subr.mxu0 0.0
        %699 = vmatpush1.msra.mxu0 0.0
        %700 = vmatprep.subr.mxu0 0.0
        %701 = vmatpush1.msra.mxu0 0.0
        %702 = vmatprep.subr.mxu0 0.0
        %703 = vmatpush1.msra.mxu0 0.0
        %704 = vmatprep.subr.mxu0 0.0
        %705 = vmatpush1.msra.mxu0 0.0
        %706 = vmatprep.subr.mxu0 0.0
        %707 = vmatpush1.msra.mxu0 0.0
        %708 = vmatprep.subr.mxu0 0.0
        %709 = vmatpush1.msra.mxu0 0.0
        %710 = vmatprep.subr.mxu0 0.0
        %711 = vmatpush1.msra.mxu0 0.0
        %712 = vmatprep.subr.mxu0 0.0
        %713 = vmatpush1.msra.mxu0 0.0
        %714 = vmatprep.subr.mxu0 0.0
        %715 = vmatpush1.msra.mxu0 0.0
        %716 = vmatprep.mubr.f32.mxu0 0.0
        %717 = vmatmul.mubr.f32.gmra.mrb[0].mxu0 %v493
        %v718 = vpop.f32.mrb[0].mxu0
        %v719 = vadd.f32 %v485, %v718
        %v720 = vpop.f32.mrb[0].mxu0
        %721 = vmatprep.mubr.f32.mxu0 0.0
        %722 = vmatmul.mubr.f32.gmra.mrb[0].mxu0 %v496
        %v723 = vpop.f32.mrb[0].mxu0
        %v724 = vadd.f32 %v485, %v723
        %v725 = vpop.f32.mrb[0].mxu0
        %726 = vdwg.mxu0
        %v727 = vld [vmem:[%s3] sm:$0xff]
        %v728 = vld [vmem:[%s3 + $0x8] sm:$0xff]
        %v729 = vld [vmem:[%s3 + $0x10] sm:$0xff]
        %v730 = vld [vmem:[%s3 + $0x18] sm:$0xff]
        %v731 = vld [vmem:[%s3 + $0x20] sm:$0xff]
        %v732 = vld [vmem:[%s3 + $0x28] sm:$0xff]
        %v733 = vld [vmem:[%s3 + $0x30] sm:$0xff]
        %v734 = vld [vmem:[%s3 + $0x38] sm:$0xff]
        %v735 = vmul.f32 %v565, %v727
        %v736 = vmul.f32 %v567, %v728
        %v737 = vmul.f32 %v642, %v729
        %v738 = vmul.f32 %v644, %v730
        %v739 = vmul.f32 %v571, %v731
        %v740 = vmul.f32 %v573, %v732
        %v741 = vmul.f32 %v648, %v733
        %v742 = vmul.f32 %v650, %v734
        %v743 = vld [vmem:[%s4] sm:$0xff]
        %v744 = vld [vmem:[%s4 + $0x8] sm:$0xff]
        %v745 = vld [vmem:[%s4 + $0x10] sm:$0xff]
        %v746 = vld [vmem:[%s4 + $0x18] sm:$0xff]
        %v747 = vld [vmem:[%s4 + $0x20] sm:$0xff]
        %v748 = vld [vmem:[%s4 + $0x28] sm:$0xff]
        %v749 = vld [vmem:[%s4 + $0x30] sm:$0xff]
        %v750 = vld [vmem:[%s4 + $0x38] sm:$0xff]
        %v751 = vld [vmem:[%s4 + $0x40] sm:$0xff]
        %v752 = vld [vmem:[%s4 + $0x48] sm:$0xff]
        %v753 = vld [vmem:[%s4 + $0x50] sm:$0xff]
        %v754 = vld [vmem:[%s4 + $0x58] sm:$0xff]
        %v755 = vld [vmem:[%s4 + $0x60] sm:$0xff]
        %v756 = vld [vmem:[%s4 + $0x68] sm:$0xff]
        %v757 = vld [vmem:[%s4 + $0x70] sm:$0xff]
        %v758 = vld [vmem:[%s4 + $0x78] sm:$0xff]
        %v759 = vld [vmem:[%s4 + $0x80] sm:$0xff]
        %v760 = vld [vmem:[%s4 + $0x88] sm:$0xff]
        %v761 = vld [vmem:[%s4 + $0x90] sm:$0xff]
        %v762 = vld [vmem:[%s4 + $0x98] sm:$0xff]
        %v763 = vld [vmem:[%s4 + $0xa0] sm:$0xff]
        %v764 = vld [vmem:[%s4 + $0xa8] sm:$0xff]
        %v765 = vld [vmem:[%s4 + $0xb0] sm:$0xff]
        %v766 = vld [vmem:[%s4 + $0xb8] sm:$0xff]
        %v767 = vld [vmem:[%s4 + $0xc0] sm:$0xff]
        %v768 = vld [vmem:[%s4 + $0xc8] sm:$0xff]
        %v769 = vld [vmem:[%s4 + $0xd0] sm:$0xff]
        %v770 = vld [vmem:[%s4 + $0xd8] sm:$0xff]
        %v771 = vld [vmem:[%s4 + $0xe0] sm:$0xff]
        %v772 = vld [vmem:[%s4 + $0xe8] sm:$0xff]
        %v773 = vld [vmem:[%s4 + $0xf0] sm:$0xff]
        %v774 = vld [vmem:[%s4 + $0xf8] sm:$0xff]
        %v775 = vld [vmem:[%s4 + $0x100] sm:$0xff]
        %v776 = vld [vmem:[%s4 + $0x108] sm:$0xff]
        %v777 = vld [vmem:[%s4 + $0x110] sm:$0xff]
        %v778 = vld [vmem:[%s4 + $0x118] sm:$0xff]
        %v779 = vld [vmem:[%s4 + $0x120] sm:$0xff]
        %v780 = vld [vmem:[%s4 + $0x128] sm:$0xff]
        %v781 = vld [vmem:[%s4 + $0x130] sm:$0xff]
        %v782 = vld [vmem:[%s4 + $0x138] sm:$0xff]
        %v783 = vld [vmem:[%s4 + $0x140] sm:$0xff]
        %v784 = vld [vmem:[%s4 + $0x148] sm:$0xff]
        %v785 = vld [vmem:[%s4 + $0x150] sm:$0xff]
        %v786 = vld [vmem:[%s4 + $0x158] sm:$0xff]
        %v787 = vld [vmem:[%s4 + $0x160] sm:$0xff]
        %v788 = vld [vmem:[%s4 + $0x168] sm:$0xff]
        %v789 = vld [vmem:[%s4 + $0x170] sm:$0xff]
        %v790 = vld [vmem:[%s4 + $0x178] sm:$0xff]
        %v791 = vld [vmem:[%s4 + $0x180] sm:$0xff]
        %v792 = vld [vmem:[%s4 + $0x188] sm:$0xff]
        %v793 = vld [vmem:[%s4 + $0x190] sm:$0xff]
        %v794 = vld [vmem:[%s4 + $0x198] sm:$0xff]
        %v795 = vld [vmem:[%s4 + $0x1a0] sm:$0xff]
        %v796 = vld [vmem:[%s4 + $0x1a8] sm:$0xff]
        %v797 = vld [vmem:[%s4 + $0x1b0] sm:$0xff]
        %v798 = vld [vmem:[%s4 + $0x1b8] sm:$0xff]
        %v799 = vld [vmem:[%s4 + $0x1c0] sm:$0xff]
        %v800 = vld [vmem:[%s4 + $0x1c8] sm:$0xff]
        %v801 = vld [vmem:[%s4 + $0x1d0] sm:$0xff]
        %v802 = vld [vmem:[%s4 + $0x1d8] sm:$0xff]
        %v803 = vld [vmem:[%s4 + $0x1e0] sm:$0xff]
        %v804 = vld [vmem:[%s4 + $0x1e8] sm:$0xff]
        %v805 = vld [vmem:[%s4 + $0x1f0] sm:$0xff]
        %v806 = vld [vmem:[%s4 + $0x1f8] sm:$0xff]
        %807 = vmatprep.subr.mxu0 0.0
        %808 = vmatpush1.msra.mxu0 %v743
        %809 = vmatprep.subr.mxu0 0.0
        %810 = vmatpush1.msra.mxu0 %v744
        %811 = vmatprep.subr.mxu0 0.0
        %812 = vmatpush1.msra.mxu0 %v745
        %813 = vmatprep.subr.mxu0 0.0
        %814 = vmatpush1.msra.mxu0 %v746
        %815 = vmatprep.subr.mxu0 0.0
        %816 = vmatpush1.msra.mxu0 %v747
        %817 = vmatprep.subr.mxu0 0.0
        %818 = vmatpush1.msra.mxu0 %v748
        %819 = vmatprep.subr.mxu0 0.0
        %820 = vmatpush1.msra.mxu0 %v749
        %821 = vmatprep.subr.mxu0 0.0
        %822 = vmatpush1.msra.mxu0 %v750
        %823 = vmatprep.subr.mxu0 0.0
        %824 = vmatpush1.msra.mxu0 %v751
        %825 = vmatprep.subr.mxu0 0.0
        %826 = vmatpush1.msra.mxu0 %v752
        %827 = vmatprep.subr.mxu0 0.0
        %828 = vmatpush1.msra.mxu0 %v753
        %829 = vmatprep.subr.mxu0 0.0
        %830 = vmatpush1.msra.mxu0 %v754
        %831 = vmatprep.subr.mxu0 0.0
        %832 = vmatpush1.msra.mxu0 %v755
        %833 = vmatprep.subr.mxu0 0.0
        %834 = vmatpush1.msra.mxu0 %v756
        %835 = vmatprep.subr.mxu0 0.0
        %836 = vmatpush1.msra.mxu0 %v757
        %837 = vmatprep.subr.mxu0 0.0
        %838 = vmatpush1.msra.mxu0 %v758
        %839 = vmatprep.subr.mxu0 0.0
        %840 = vmatpush1.msra.mxu0 %v759
        %841 = vmatprep.subr.mxu0 0.0
        %842 = vmatpush1.msra.mxu0 %v760
        %843 = vmatprep.subr.mxu0 0.0
        %844 = vmatpush1.msra.mxu0 %v761
        %845 = vmatprep.subr.mxu0 0.0
        %846 = vmatpush1.msra.mxu0 %v762
        %847 = vmatprep.subr.mxu0 0.0
        %848 = vmatpush1.msra.mxu0 %v763
        %849 = vmatprep.subr.mxu0 0.0
        %850 = vmatpush1.msra.mxu0 %v764
        %851 = vmatprep.subr.mxu0 0.0
        %852 = vmatpush1.msra.mxu0 %v765
        %853 = vmatprep.subr.mxu0 0.0
        %854 = vmatpush1.msra.mxu0 %v766
        %855 = vmatprep.subr.mxu0 0.0
        %856 = vmatpush1.msra.mxu0 %v767
        %857 = vmatprep.subr.mxu0 0.0
        %858 = vmatpush1.msra.mxu0 %v768
        %859 = vmatprep.subr.mxu0 0.0
        %860 = vmatpush1.msra.mxu0 %v769
        %861 = vmatprep.subr.mxu0 0.0
        %862 = vmatpush1.msra.mxu0 %v770
        %863 = vmatprep.subr.mxu0 0.0
        %864 = vmatpush1.msra.mxu0 %v771
        %865 = vmatprep.subr.mxu0 0.0
        %866 = vmatpush1.msra.mxu0 %v772
        %867 = vmatprep.subr.mxu0 0.0
        %868 = vmatpush1.msra.mxu0 %v773
        %869 = vmatprep.subr.mxu0 0.0
        %870 = vmatpush1.msra.mxu0 %v774
        %871 = vmatprep.mubr.f32.mxu0 %v736
        %872 = vmatmul.mubr.f32.gmra.mrb[0].mxu0 %v735
        %v873 = vpop.f32.mrb[0].mxu0
        %v874 = vadd.f32 0.0, %v873
        %v875 = vpop.f32.mrb[0].mxu0
        %876 = vmatprep.mubr.f32.mxu0 %v740
        %877 = vmatmul.mubr.f32.gmra.mrb[0].mxu0 %v739
        %v878 = vpop.f32.mrb[0].mxu0
        %v879 = vadd.f32 0.0, %v878
        %v880 = vpop.f32.mrb[0].mxu0
        %881 = vdwg.mxu0
        %882 = vmatprep.subr.mxu0 0.0
        %883 = vmatpush1.msra.mxu0 %v775
        %884 = vmatprep.subr.mxu0 0.0
        %885 = vmatpush1.msra.mxu0 %v776
        %886 = vmatprep.subr.mxu0 0.0
        %887 = vmatpush1.msra.mxu0 %v777
        %888 = vmatprep.subr.mxu0 0.0
        %889 = vmatpush1.msra.mxu0 %v778
        %890 = vmatprep.subr.mxu0 0.0
        %891 = vmatpush1.msra.mxu0 %v779
        %892 = vmatprep.subr.mxu0 0.0
        %893 = vmatpush1.msra.mxu0 %v780
        %894 = vmatprep.subr.mxu0 0.0
        %895 = vmatpush1.msra.mxu0 %v781
        %896 = vmatprep.subr.mxu0 0.0
        %897 = vmatpush1.msra.mxu0 %v782
        %898 = vmatprep.subr.mxu0 0.0
        %899 = vmatpush1.msra.mxu0 %v783
        %900 = vmatprep.subr.mxu0 0.0
        %901 = vmatpush1.msra.mxu0 %v784
        %902 = vmatprep.subr.mxu0 0.0
        %903 = vmatpush1.msra.mxu0 %v785
        %904 = vmatprep.subr.mxu0 0.0
        %905 = vmatpush1.msra.mxu0 %v786
        %906 = vmatprep.subr.mxu0 0.0
        %907 = vmatpush1.msra.mxu0 %v787
        %908 = vmatprep.subr.mxu0 0.0
        %909 = vmatpush1.msra.mxu0 %v788
        %910 = vmatprep.subr.mxu0 0.0
        %911 = vmatpush1.msra.mxu0 %v789
        %912 = vmatprep.subr.mxu0 0.0
        %913 = vmatpush1.msra.mxu0 %v790
        %914 = vmatprep.subr.mxu0 0.0
        %915 = vmatpush1.msra.mxu0 %v791
        %916 = vmatprep.subr.mxu0 0.0
        %917 = vmatpush1.msra.mxu0 %v792
        %918 = vmatprep.subr.mxu0 0.0
        %919 = vmatpush1.msra.mxu0 %v793
        %920 = vmatprep.subr.mxu0 0.0
        %921 = vmatpush1.msra.mxu0 %v794
        %922 = vmatprep.subr.mxu0 0.0
        %923 = vmatpush1.msra.mxu0 %v795
        %924 = vmatprep.subr.mxu0 0.0
        %925 = vmatpush1.msra.mxu0 %v796
        %926 = vmatprep.subr.mxu0 0.0
        %927 = vmatpush1.msra.mxu0 %v797
        %928 = vmatprep.subr.mxu0 0.0
        %929 = vmatpush1.msra.mxu0 %v798
        %930 = vmatprep.subr.mxu0 0.0
        %931 = vmatpush1.msra.mxu0 %v799
        %932 = vmatprep.subr.mxu0 0.0
        %933 = vmatpush1.msra.mxu0 %v800
        %934 = vmatprep.subr.mxu0 0.0
        %935 = vmatpush1.msra.mxu0 %v801
        %936 = vmatprep.subr.mxu0 0.0
        %937 = vmatpush1.msra.mxu0 %v802
        %938 = vmatprep.subr.mxu0 0.0
        %939 = vmatpush1.msra.mxu0 %v803
        %940 = vmatprep.subr.mxu0 0.0
        %941 = vmatpush1.msra.mxu0 %v804
        %942 = vmatprep.subr.mxu0 0.0
        %943 = vmatpush1.msra.mxu0 %v805
        %944 = vmatprep.subr.mxu0 0.0
        %945 = vmatpush1.msra.mxu0 %v806
        %946 = vmatprep.mubr.f32.mxu0 %v738
        %947 = vmatmul.mubr.f32.gmra.mrb[0].mxu0 %v737
        %v948 = vpop.f32.mrb[0].mxu0
        %v949 = vadd.f32 %v874, %v948
        %v950 = vpop.f32.mrb[0].mxu0
        %951 = vmatprep.mubr.f32.mxu0 %v742
        %952 = vmatmul.mubr.f32.gmra.mrb[0].mxu0 %v741
        %v953 = vpop.f32.mrb[0].mxu0
        %v954 = vadd.f32 %v879, %v953
        %v955 = vpop.f32.mrb[0].mxu0
        %956 = vdwg.mxu0
        %s957 = scalar_lea.vmem %s4, 512
        %v958 = vld [vmem:[%s957] sm:$0xff]
        %v959 = vld [vmem:[%s957 + $0x8] sm:$0xff]
        %v960 = vld [vmem:[%s957 + $0x10] sm:$0xff]
        %v961 = vld [vmem:[%s957 + $0x18] sm:$0xff]
        %v962 = vld [vmem:[%s957 + $0x20] sm:$0xff]
        %v963 = vld [vmem:[%s957 + $0x28] sm:$0xff]
        %v964 = vld [vmem:[%s957 + $0x30] sm:$0xff]
        %v965 = vld [vmem:[%s957 + $0x38] sm:$0xff]
        %v966 = vld [vmem:[%s957 + $0x40] sm:$0xff]
        %v967 = vld [vmem:[%s957 + $0x48] sm:$0xff]
        %v968 = vld [vmem:[%s957 + $0x50] sm:$0xff]
        %v969 = vld [vmem:[%s957 + $0x58] sm:$0xff]
        %v970 = vld [vmem:[%s957 + $0x60] sm:$0xff]
        %v971 = vld [vmem:[%s957 + $0x68] sm:$0xff]
        %v972 = vld [vmem:[%s957 + $0x70] sm:$0xff]
        %v973 = vld [vmem:[%s957 + $0x78] sm:$0xff]
        %v974 = vld [vmem:[%s957 + $0x80] sm:$0xff]
        %v975 = vld [vmem:[%s957 + $0x88] sm:$0xff]
        %v976 = vld [vmem:[%s957 + $0x90] sm:$0xff]
        %v977 = vld [vmem:[%s957 + $0x98] sm:$0xff]
        %v978 = vld [vmem:[%s957 + $0xa0] sm:$0xff]
        %v979 = vld [vmem:[%s957 + $0xa8] sm:$0xff]
        %v980 = vld [vmem:[%s957 + $0xb0] sm:$0xff]
        %v981 = vld [vmem:[%s957 + $0xb8] sm:$0xff]
        %v982 = vld [vmem:[%s957 + $0xc0] sm:$0xff]
        %v983 = vld [vmem:[%s957 + $0xc8] sm:$0xff]
        %v984 = vld [vmem:[%s957 + $0xd0] sm:$0xff]
        %v985 = vld [vmem:[%s957 + $0xd8] sm:$0xff]
        %v986 = vld [vmem:[%s957 + $0xe0] sm:$0xff]
        %v987 = vld [vmem:[%s957 + $0xe8] sm:$0xff]
        %v988 = vld [vmem:[%s957 + $0xf0] sm:$0xff]
        %v989 = vld [vmem:[%s957 + $0xf8] sm:$0xff]
        %v990 = vld [vmem:[%s957 + $0x100] sm:$0xff]
        %v991 = vld [vmem:[%s957 + $0x108] sm:$0xff]
        %v992 = vld [vmem:[%s957 + $0x110] sm:$0xff]
        %v993 = vld [vmem:[%s957 + $0x118] sm:$0xff]
        %v994 = vld [vmem:[%s957 + $0x120] sm:$0xff]
        %v995 = vld [vmem:[%s957 + $0x128] sm:$0xff]
        %v996 = vld [vmem:[%s957 + $0x130] sm:$0xff]
        %v997 = vld [vmem:[%s957 + $0x138] sm:$0xff]
        %v998 = vld [vmem:[%s957 + $0x140] sm:$0xff]
        %v999 = vld [vmem:[%s957 + $0x148] sm:$0xff]
        %v1000 = vld [vmem:[%s957 + $0x150] sm:$0xff]
        %v1001 = vld [vmem:[%s957 + $0x158] sm:$0xff]
        %v1002 = vld [vmem:[%s957 + $0x160] sm:$0xff]
        %v1003 = vld [vmem:[%s957 + $0x168] sm:$0xff]
        %v1004 = vld [vmem:[%s957 + $0x170] sm:$0xff]
        %v1005 = vld [vmem:[%s957 + $0x178] sm:$0xff]
        %v1006 = vld [vmem:[%s957 + $0x180] sm:$0xff]
        %v1007 = vld [vmem:[%s957 + $0x188] sm:$0xff]
        %v1008 = vld [vmem:[%s957 + $0x190] sm:$0xff]
        %v1009 = vld [vmem:[%s957 + $0x198] sm:$0xff]
        %v1010 = vld [vmem:[%s957 + $0x1a0] sm:$0xff]
        %v1011 = vld [vmem:[%s957 + $0x1a8] sm:$0xff]
        %v1012 = vld [vmem:[%s957 + $0x1b0] sm:$0xff]
        %v1013 = vld [vmem:[%s957 + $0x1b8] sm:$0xff]
        %v1014 = vld [vmem:[%s957 + $0x1c0] sm:$0xff]
        %v1015 = vld [vmem:[%s957 + $0x1c8] sm:$0xff]
        %v1016 = vld [vmem:[%s957 + $0x1d0] sm:$0xff]
        %v1017 = vld [vmem:[%s957 + $0x1d8] sm:$0xff]
        %v1018 = vld [vmem:[%s957 + $0x1e0] sm:$0xff]
        %v1019 = vld [vmem:[%s957 + $0x1e8] sm:$0xff]
        %v1020 = vld [vmem:[%s957 + $0x1f0] sm:$0xff]
        %v1021 = vld [vmem:[%s957 + $0x1f8] sm:$0xff]
        %1022 = vmatprep.subr.mxu0 0.0
        %1023 = vmatpush1.msra.mxu0 %v958
        %1024 = vmatprep.subr.mxu0 0.0
        %1025 = vmatpush1.msra.mxu0 %v959
        %1026 = vmatprep.subr.mxu0 0.0
        %1027 = vmatpush1.msra.mxu0 %v960
        %1028 = vmatprep.subr.mxu0 0.0
        %1029 = vmatpush1.msra.mxu0 %v961
        %1030 = vmatprep.subr.mxu0 0.0
        %1031 = vmatpush1.msra.mxu0 %v962
        %1032 = vmatprep.subr.mxu0 0.0
        %1033 = vmatpush1.msra.mxu0 %v963
        %1034 = vmatprep.subr.mxu0 0.0
        %1035 = vmatpush1.msra.mxu0 %v964
        %1036 = vmatprep.subr.mxu0 0.0
        %1037 = vmatpush1.msra.mxu0 %v965
        %1038 = vmatprep.subr.mxu0 0.0
        %1039 = vmatpush1.msra.mxu0 %v966
        %1040 = vmatprep.subr.mxu0 0.0
        %1041 = vmatpush1.msra.mxu0 %v967
        %1042 = vmatprep.subr.mxu0 0.0
        %1043 = vmatpush1.msra.mxu0 %v968
        %1044 = vmatprep.subr.mxu0 0.0
        %1045 = vmatpush1.msra.mxu0 %v969
        %1046 = vmatprep.subr.mxu0 0.0
        %1047 = vmatpush1.msra.mxu0 %v970
        %1048 = vmatprep.subr.mxu0 0.0
        %1049 = vmatpush1.msra.mxu0 %v971
        %1050 = vmatprep.subr.mxu0 0.0
        %1051 = vmatpush1.msra.mxu0 %v972
        %1052 = vmatprep.subr.mxu0 0.0
        %1053 = vmatpush1.msra.mxu0 %v973
        %1054 = vmatprep.subr.mxu0 0.0
        %1055 = vmatpush1.msra.mxu0 %v974
        %1056 = vmatprep.subr.mxu0 0.0
        %1057 = vmatpush1.msra.mxu0 %v975
        %1058 = vmatprep.subr.mxu0 0.0
        %1059 = vmatpush1.msra.mxu0 %v976
        %1060 = vmatprep.subr.mxu0 0.0
        %1061 = vmatpush1.msra.mxu0 %v977
        %1062 = vmatprep.subr.mxu0 0.0
        %1063 = vmatpush1.msra.mxu0 %v978
        %1064 = vmatprep.subr.mxu0 0.0
        %1065 = vmatpush1.msra.mxu0 %v979
        %1066 = vmatprep.subr.mxu0 0.0
        %1067 = vmatpush1.msra.mxu0 %v980
        %1068 = vmatprep.subr.mxu0 0.0
        %1069 = vmatpush1.msra.mxu0 %v981
        %1070 = vmatprep.subr.mxu0 0.0
        %1071 = vmatpush1.msra.mxu0 %v982
        %1072 = vmatprep.subr.mxu0 0.0
        %1073 = vmatpush1.msra.mxu0 %v983
        %1074 = vmatprep.subr.mxu0 0.0
        %1075 = vmatpush1.msra.mxu0 %v984
        %1076 = vmatprep.subr.mxu0 0.0
        %1077 = vmatpush1.msra.mxu0 %v985
        %1078 = vmatprep.subr.mxu0 0.0
        %1079 = vmatpush1.msra.mxu0 %v986
        %1080 = vmatprep.subr.mxu0 0.0
        %1081 = vmatpush1.msra.mxu0 %v987
        %1082 = vmatprep.subr.mxu0 0.0
        %1083 = vmatpush1.msra.mxu0 %v988
        %1084 = vmatprep.subr.mxu0 0.0
        %1085 = vmatpush1.msra.mxu0 %v989
        %1086 = vmatprep.mubr.f32.mxu0 %v736
        %1087 = vmatmul.mubr.f32.gmra.mrb[0].mxu0 %v735
        %v1088 = vpop.f32.mrb[0].mxu0
        %v1089 = vadd.f32 0.0, %v1088
        %v1090 = vpop.f32.mrb[0].mxu0
        %1091 = vmatprep.mubr.f32.mxu0 %v740
        %1092 = vmatmul.mubr.f32.gmra.mrb[0].mxu0 %v739
        %v1093 = vpop.f32.mrb[0].mxu0
        %v1094 = vadd.f32 0.0, %v1093
        %v1095 = vpop.f32.mrb[0].mxu0
        %1096 = vdwg.mxu0
        %1097 = vmatprep.subr.mxu0 0.0
        %1098 = vmatpush1.msra.mxu0 %v990
        %1099 = vmatprep.subr.mxu0 0.0
        %1100 = vmatpush1.msra.mxu0 %v991
        %1101 = vmatprep.subr.mxu0 0.0
        %1102 = vmatpush1.msra.mxu0 %v992
        %1103 = vmatprep.subr.mxu0 0.0
        %1104 = vmatpush1.msra.mxu0 %v993
        %1105 = vmatprep.subr.mxu0 0.0
        %1106 = vmatpush1.msra.mxu0 %v994
        %1107 = vmatprep.subr.mxu0 0.0
        %1108 = vmatpush1.msra.mxu0 %v995
        %1109 = vmatprep.subr.mxu0 0.0
        %1110 = vmatpush1.msra.mxu0 %v996
        %1111 = vmatprep.subr.mxu0 0.0
        %1112 = vmatpush1.msra.mxu0 %v997
        %1113 = vmatprep.subr.mxu0 0.0
        %1114 = vmatpush1.msra.mxu0 %v998
        %1115 = vmatprep.subr.mxu0 0.0
        %1116 = vmatpush1.msra.mxu0 %v999
        %1117 = vmatprep.subr.mxu0 0.0
        %1118 = vmatpush1.msra.mxu0 %v1000
        %1119 = vmatprep.subr.mxu0 0.0
        %1120 = vmatpush1.msra.mxu0 %v1001
        %1121 = vmatprep.subr.mxu0 0.0
        %1122 = vmatpush1.msra.mxu0 %v1002
        %1123 = vmatprep.subr.mxu0 0.0
        %1124 = vmatpush1.msra.mxu0 %v1003
        %1125 = vmatprep.subr.mxu0 0.0
        %1126 = vmatpush1.msra.mxu0 %v1004
        %1127 = vmatprep.subr.mxu0 0.0
        %1128 = vmatpush1.msra.mxu0 %v1005
        %1129 = vmatprep.subr.mxu0 0.0
        %1130 = vmatpush1.msra.mxu0 %v1006
        %1131 = vmatprep.subr.mxu0 0.0
        %1132 = vmatpush1.msra.mxu0 %v1007
        %1133 = vmatprep.subr.mxu0 0.0
        %1134 = vmatpush1.msra.mxu0 %v1008
        %1135 = vmatprep.subr.mxu0 0.0
        %1136 = vmatpush1.msra.mxu0 %v1009
        %1137 = vmatprep.subr.mxu0 0.0
        %1138 = vmatpush1.msra.mxu0 %v1010
        %1139 = vmatprep.subr.mxu0 0.0
        %1140 = vmatpush1.msra.mxu0 %v1011
        %1141 = vmatprep.subr.mxu0 0.0
        %1142 = vmatpush1.msra.mxu0 %v1012
        %1143 = vmatprep.subr.mxu0 0.0
        %1144 = vmatpush1.msra.mxu0 %v1013
        %1145 = vmatprep.subr.mxu0 0.0
        %1146 = vmatpush1.msra.mxu0 %v1014
        %1147 = vmatprep.subr.mxu0 0.0
        %1148 = vmatpush1.msra.mxu0 %v1015
        %1149 = vmatprep.subr.mxu0 0.0
        %1150 = vmatpush1.msra.mxu0 %v1016
        %1151 = vmatprep.subr.mxu0 0.0
        %1152 = vmatpush1.msra.mxu0 %v1017
        %1153 = vmatprep.subr.mxu0 0.0
        %1154 = vmatpush1.msra.mxu0 %v1018
        %1155 = vmatprep.subr.mxu0 0.0
        %1156 = vmatpush1.msra.mxu0 %v1019
        %1157 = vmatprep.subr.mxu0 0.0
        %1158 = vmatpush1.msra.mxu0 %v1020
        %1159 = vmatprep.subr.mxu0 0.0
        %1160 = vmatpush1.msra.mxu0 %v1021
        %1161 = vmatprep.mubr.f32.mxu0 %v738
        %1162 = vmatmul.mubr.f32.gmra.mrb[0].mxu0 %v737
        %v1163 = vpop.f32.mrb[0].mxu0
        %v1164 = vadd.f32 %v1089, %v1163
        %v1165 = vpop.f32.mrb[0].mxu0
        %1166 = vmatprep.mubr.f32.mxu0 %v742
        %1167 = vmatmul.mubr.f32.gmra.mrb[0].mxu0 %v741
        %v1168 = vpop.f32.mrb[0].mxu0
        %v1169 = vadd.f32 %v1094, %v1168
        %v1170 = vpop.f32.mrb[0].mxu0
        %1171 = vdwg.mxu0
        %s1172 = scalar_lea.vmem %s4, 1024
        %v1173 = vld [vmem:[%s1172] sm:$0xff]
        %v1174 = vld [vmem:[%s1172 + $0x8] sm:$0xff]
        %v1175 = vld [vmem:[%s1172 + $0x10] sm:$0xff]
        %v1176 = vld [vmem:[%s1172 + $0x18] sm:$0xff]
        %v1177 = vld [vmem:[%s1172 + $0x20] sm:$0xff]
        %v1178 = vld [vmem:[%s1172 + $0x28] sm:$0xff]
        %v1179 = vld [vmem:[%s1172 + $0x30] sm:$0xff]
        %v1180 = vld [vmem:[%s1172 + $0x38] sm:$0xff]
        %v1181 = vld [vmem:[%s1172 + $0x40] sm:$0xff]
        %v1182 = vld [vmem:[%s1172 + $0x48] sm:$0xff]
        %v1183 = vld [vmem:[%s1172 + $0x50] sm:$0xff]
        %v1184 = vld [vmem:[%s1172 + $0x58] sm:$0xff]
        %v1185 = vld [vmem:[%s1172 + $0x60] sm:$0xff]
        %v1186 = vld [vmem:[%s1172 + $0x68] sm:$0xff]
        %v1187 = vld [vmem:[%s1172 + $0x70] sm:$0xff]
        %v1188 = vld [vmem:[%s1172 + $0x78] sm:$0xff]
        %v1189 = vld [vmem:[%s1172 + $0x80] sm:$0xff]
        %v1190 = vld [vmem:[%s1172 + $0x88] sm:$0xff]
        %v1191 = vld [vmem:[%s1172 + $0x90] sm:$0xff]
        %v1192 = vld [vmem:[%s1172 + $0x98] sm:$0xff]
        %v1193 = vld [vmem:[%s1172 + $0xa0] sm:$0xff]
        %v1194 = vld [vmem:[%s1172 + $0xa8] sm:$0xff]
        %v1195 = vld [vmem:[%s1172 + $0xb0] sm:$0xff]
        %v1196 = vld [vmem:[%s1172 + $0xb8] sm:$0xff]
        %v1197 = vld [vmem:[%s1172 + $0xc0] sm:$0xff]
        %v1198 = vld [vmem:[%s1172 + $0xc8] sm:$0xff]
        %v1199 = vld [vmem:[%s1172 + $0xd0] sm:$0xff]
        %v1200 = vld [vmem:[%s1172 + $0xd8] sm:$0xff]
        %v1201 = vld [vmem:[%s1172 + $0xe0] sm:$0xff]
        %v1202 = vld [vmem:[%s1172 + $0xe8] sm:$0xff]
        %v1203 = vld [vmem:[%s1172 + $0xf0] sm:$0xff]
        %v1204 = vld [vmem:[%s1172 + $0xf8] sm:$0xff]
        %v1205 = vld [vmem:[%s1172 + $0x100] sm:$0xff]
        %v1206 = vld [vmem:[%s1172 + $0x108] sm:$0xff]
        %v1207 = vld [vmem:[%s1172 + $0x110] sm:$0xff]
        %v1208 = vld [vmem:[%s1172 + $0x118] sm:$0xff]
        %v1209 = vld [vmem:[%s1172 + $0x120] sm:$0xff]
        %v1210 = vld [vmem:[%s1172 + $0x128] sm:$0xff]
        %v1211 = vld [vmem:[%s1172 + $0x130] sm:$0xff]
        %v1212 = vld [vmem:[%s1172 + $0x138] sm:$0xff]
        %v1213 = vld [vmem:[%s1172 + $0x140] sm:$0xff]
        %v1214 = vld [vmem:[%s1172 + $0x148] sm:$0xff]
        %v1215 = vld [vmem:[%s1172 + $0x150] sm:$0xff]
        %v1216 = vld [vmem:[%s1172 + $0x158] sm:$0xff]
        %v1217 = vld [vmem:[%s1172 + $0x160] sm:$0xff]
        %v1218 = vld [vmem:[%s1172 + $0x168] sm:$0xff]
        %v1219 = vld [vmem:[%s1172 + $0x170] sm:$0xff]
        %v1220 = vld [vmem:[%s1172 + $0x178] sm:$0xff]
        %v1221 = vld [vmem:[%s1172 + $0x180] sm:$0xff]
        %v1222 = vld [vmem:[%s1172 + $0x188] sm:$0xff]
        %v1223 = vld [vmem:[%s1172 + $0x190] sm:$0xff]
        %v1224 = vld [vmem:[%s1172 + $0x198] sm:$0xff]
        %v1225 = vld [vmem:[%s1172 + $0x1a0] sm:$0xff]
        %v1226 = vld [vmem:[%s1172 + $0x1a8] sm:$0xff]
        %v1227 = vld [vmem:[%s1172 + $0x1b0] sm:$0xff]
        %v1228 = vld [vmem:[%s1172 + $0x1b8] sm:$0xff]
        %v1229 = vld [vmem:[%s1172 + $0x1c0] sm:$0xff]
        %v1230 = vld [vmem:[%s1172 + $0x1c8] sm:$0xff]
        %v1231 = vld [vmem:[%s1172 + $0x1d0] sm:$0xff]
        %v1232 = vld [vmem:[%s1172 + $0x1d8] sm:$0xff]
        %v1233 = vld [vmem:[%s1172 + $0x1e0] sm:$0xff]
        %v1234 = vld [vmem:[%s1172 + $0x1e8] sm:$0xff]
        %v1235 = vld [vmem:[%s1172 + $0x1f0] sm:$0xff]
        %v1236 = vld [vmem:[%s1172 + $0x1f8] sm:$0xff]
        %1237 = vmatprep.subr.mxu0 0.0
        %1238 = vmatpush1.msra.mxu0 %v1173
        %1239 = vmatprep.subr.mxu0 0.0
        %1240 = vmatpush1.msra.mxu0 %v1174
        %1241 = vmatprep.subr.mxu0 0.0
        %1242 = vmatpush1.msra.mxu0 %v1175
        %1243 = vmatprep.subr.mxu0 0.0
        %1244 = vmatpush1.msra.mxu0 %v1176
        %1245 = vmatprep.subr.mxu0 0.0
        %1246 = vmatpush1.msra.mxu0 %v1177
        %1247 = vmatprep.subr.mxu0 0.0
        %1248 = vmatpush1.msra.mxu0 %v1178
        %1249 = vmatprep.subr.mxu0 0.0
        %1250 = vmatpush1.msra.mxu0 %v1179
        %1251 = vmatprep.subr.mxu0 0.0
        %1252 = vmatpush1.msra.mxu0 %v1180
        %1253 = vmatprep.subr.mxu0 0.0
        %1254 = vmatpush1.msra.mxu0 %v1181
        %1255 = vmatprep.subr.mxu0 0.0
        %1256 = vmatpush1.msra.mxu0 %v1182
        %1257 = vmatprep.subr.mxu0 0.0
        %1258 = vmatpush1.msra.mxu0 %v1183
        %1259 = vmatprep.subr.mxu0 0.0
        %1260 = vmatpush1.msra.mxu0 %v1184
        %1261 = vmatprep.subr.mxu0 0.0
        %1262 = vmatpush1.msra.mxu0 %v1185
        %1263 = vmatprep.subr.mxu0 0.0
        %1264 = vmatpush1.msra.mxu0 %v1186
        %1265 = vmatprep.subr.mxu0 0.0
        %1266 = vmatpush1.msra.mxu0 %v1187
        %1267 = vmatprep.subr.mxu0 0.0
        %1268 = vmatpush1.msra.mxu0 %v1188
        %1269 = vmatprep.subr.mxu0 0.0
        %1270 = vmatpush1.msra.mxu0 %v1189
        %1271 = vmatprep.subr.mxu0 0.0
        %1272 = vmatpush1.msra.mxu0 %v1190
        %1273 = vmatprep.subr.mxu0 0.0
        %1274 = vmatpush1.msra.mxu0 %v1191
        %1275 = vmatprep.subr.mxu0 0.0
        %1276 = vmatpush1.msra.mxu0 %v1192
        %1277 = vmatprep.subr.mxu0 0.0
        %1278 = vmatpush1.msra.mxu0 %v1193
        %1279 = vmatprep.subr.mxu0 0.0
        %1280 = vmatpush1.msra.mxu0 %v1194
        %1281 = vmatprep.subr.mxu0 0.0
        %1282 = vmatpush1.msra.mxu0 %v1195
        %1283 = vmatprep.subr.mxu0 0.0
        %1284 = vmatpush1.msra.mxu0 %v1196
        %1285 = vmatprep.subr.mxu0 0.0
        %1286 = vmatpush1.msra.mxu0 %v1197
        %1287 = vmatprep.subr.mxu0 0.0
        %1288 = vmatpush1.msra.mxu0 %v1198
        %1289 = vmatprep.subr.mxu0 0.0
        %1290 = vmatpush1.msra.mxu0 %v1199
        %1291 = vmatprep.subr.mxu0 0.0
        %1292 = vmatpush1.msra.mxu0 %v1200
        %1293 = vmatprep.subr.mxu0 0.0
        %1294 = vmatpush1.msra.mxu0 %v1201
        %1295 = vmatprep.subr.mxu0 0.0
        %1296 = vmatpush1.msra.mxu0 %v1202
        %1297 = vmatprep.subr.mxu0 0.0
        %1298 = vmatpush1.msra.mxu0 %v1203
        %1299 = vmatprep.subr.mxu0 0.0
        %1300 = vmatpush1.msra.mxu0 %v1204
        %1301 = vmatprep.mubr.f32.mxu0 %v736
        %1302 = vmatmul.mubr.f32.gmra.mrb[0].mxu0 %v735
        %v1303 = vpop.f32.mrb[0].mxu0
        %v1304 = vadd.f32 0.0, %v1303
        %v1305 = vpop.f32.mrb[0].mxu0
        %1306 = vmatprep.mubr.f32.mxu0 %v740
        %1307 = vmatmul.mubr.f32.gmra.mrb[0].mxu0 %v739
        %v1308 = vpop.f32.mrb[0].mxu0
        %v1309 = vadd.f32 0.0, %v1308
        %v1310 = vpop.f32.mrb[0].mxu0
        %1311 = vdwg.mxu0
        %1312 = vmatprep.subr.mxu0 0.0
        %1313 = vmatpush1.msra.mxu0 %v1205
        %1314 = vmatprep.subr.mxu0 0.0
        %1315 = vmatpush1.msra.mxu0 %v1206
        %1316 = vmatprep.subr.mxu0 0.0
        %1317 = vmatpush1.msra.mxu0 %v1207
        %1318 = vmatprep.subr.mxu0 0.0
        %1319 = vmatpush1.msra.mxu0 %v1208
        %1320 = vmatprep.subr.mxu0 0.0
        %1321 = vmatpush1.msra.mxu0 %v1209
        %1322 = vmatprep.subr.mxu0 0.0
        %1323 = vmatpush1.msra.mxu0 %v1210
        %1324 = vmatprep.subr.mxu0 0.0
        %1325 = vmatpush1.msra.mxu0 %v1211
        %1326 = vmatprep.subr.mxu0 0.0
        %1327 = vmatpush1.msra.mxu0 %v1212
        %1328 = vmatprep.subr.mxu0 0.0
        %1329 = vmatpush1.msra.mxu0 %v1213
        %1330 = vmatprep.subr.mxu0 0.0
        %1331 = vmatpush1.msra.mxu0 %v1214
        %1332 = vmatprep.subr.mxu0 0.0
        %1333 = vmatpush1.msra.mxu0 %v1215
        %1334 = vmatprep.subr.mxu0 0.0
        %1335 = vmatpush1.msra.mxu0 %v1216
        %1336 = vmatprep.subr.mxu0 0.0
        %1337 = vmatpush1.msra.mxu0 %v1217
        %1338 = vmatprep.subr.mxu0 0.0
        %1339 = vmatpush1.msra.mxu0 %v1218
        %1340 = vmatprep.subr.mxu0 0.0
        %1341 = vmatpush1.msra.mxu0 %v1219
        %1342 = vmatprep.subr.mxu0 0.0
        %1343 = vmatpush1.msra.mxu0 %v1220
        %1344 = vmatprep.subr.mxu0 0.0
        %1345 = vmatpush1.msra.mxu0 %v1221
        %1346 = vmatprep.subr.mxu0 0.0
        %1347 = vmatpush1.msra.mxu0 %v1222
        %1348 = vmatprep.subr.mxu0 0.0
        %1349 = vmatpush1.msra.mxu0 %v1223
        %1350 = vmatprep.subr.mxu0 0.0
        %1351 = vmatpush1.msra.mxu0 %v1224
        %1352 = vmatprep.subr.mxu0 0.0
        %1353 = vmatpush1.msra.mxu0 %v1225
        %1354 = vmatprep.subr.mxu0 0.0
        %1355 = vmatpush1.msra.mxu0 %v1226
        %1356 = vmatprep.subr.mxu0 0.0
        %1357 = vmatpush1.msra.mxu0 %v1227
        %1358 = vmatprep.subr.mxu0 0.0
        %1359 = vmatpush1.msra.mxu0 %v1228
        %1360 = vmatprep.subr.mxu0 0.0
        %1361 = vmatpush1.msra.mxu0 %v1229
        %1362 = vmatprep.subr.mxu0 0.0
        %1363 = vmatpush1.msra.mxu0 %v1230
        %1364 = vmatprep.subr.mxu0 0.0
        %1365 = vmatpush1.msra.mxu0 %v1231
        %1366 = vmatprep.subr.mxu0 0.0
        %1367 = vmatpush1.msra.mxu0 %v1232
        %1368 = vmatprep.subr.mxu0 0.0
        %1369 = vmatpush1.msra.mxu0 %v1233
        %1370 = vmatprep.subr.mxu0 0.0
        %1371 = vmatpush1.msra.mxu0 %v1234
        %1372 = vmatprep.subr.mxu0 0.0
        %1373 = vmatpush1.msra.mxu0 %v1235
        %1374 = vmatprep.subr.mxu0 0.0
        %1375 = vmatpush1.msra.mxu0 %v1236
        %1376 = vmatprep.mubr.f32.mxu0 %v738
        %1377 = vmatmul.mubr.f32.gmra.mrb[0].mxu0 %v737
        %v1378 = vpop.f32.mrb[0].mxu0
        %v1379 = vadd.f32 %v1304, %v1378
        %v1380 = vpop.f32.mrb[0].mxu0
        %1381 = vmatprep.mubr.f32.mxu0 %v742
        %1382 = vmatmul.mubr.f32.gmra.mrb[0].mxu0 %v741
        %v1383 = vpop.f32.mrb[0].mxu0
        %v1384 = vadd.f32 %v1309, %v1383
        %v1385 = vpop.f32.mrb[0].mxu0
        %1386 = vdwg.mxu0
        %v1387 = vld [vmem:[%s5] sm:$0xff]
        %v1388 = vld [vmem:[%s5 + $0x8] sm:$0xff]
        %v1389 = vld [vmem:[%s5 + $0x10] sm:$0xff]
        %v1390 = vld [vmem:[%s5 + $0x18] sm:$0xff]
        %v1391 = vld [vmem:[%s5 + $0x20] sm:$0xff]
        %v1392 = vld [vmem:[%s5 + $0x28] sm:$0xff]
        %v1393 = vld [vmem:[%s5 + $0x30] sm:$0xff]
        %v1394 = vld [vmem:[%s5 + $0x38] sm:$0xff]
        %v1395 = vld [vmem:[%s6] sm:$0xff]
        %v1396 = vld [vmem:[%s6 + $0x8] sm:$0xff]
        %v1397 = vld [vmem:[%s6 + $0x10] sm:$0xff]
        %v1398 = vld [vmem:[%s6 + $0x18] sm:$0xff]
        %v1399 = vld [vmem:[%s6 + $0x20] sm:$0xff]
        %v1400 = vld [vmem:[%s6 + $0x28] sm:$0xff]
        %v1401 = vld [vmem:[%s6 + $0x30] sm:$0xff]
        %v1402 = vld [vmem:[%s6 + $0x38] sm:$0xff]
        %s1403 = scalar_lea.vmem %s6, 64
        %v1404 = vld [vmem:[%s1403] sm:$0xff]
        %v1405 = vld [vmem:[%s1403 + $0x8] sm:$0xff]
        %v1406 = vld [vmem:[%s1403 + $0x10] sm:$0xff]
        %v1407 = vld [vmem:[%s1403 + $0x18] sm:$0xff]
        %v1408 = vld [vmem:[%s1403 + $0x20] sm:$0xff]
        %v1409 = vld [vmem:[%s1403 + $0x28] sm:$0xff]
        %v1410 = vld [vmem:[%s1403 + $0x30] sm:$0xff]
        %v1411 = vld [vmem:[%s1403 + $0x38] sm:$0xff]
        %vm1412 = vcmask 130048
        %v1414 = vsel %vm1412, %v1387, 0
        %v1417 = vsel %vm1412, %v1388, 0
        %v1420 = vsel %vm1412, %v1389, 0
        %v1423 = vsel %vm1412, %v1390, 0
        %v1426 = vsel %vm1412, %v1391, 0
        %v1429 = vsel %vm1412, %v1392, 0
        %v1432 = vsel %vm1412, %v1393, 0
        %v1435 = vsel %vm1412, %v1394, 0
        %1437 = vmatprep.subr.mxu0 0.0
        %1438 = vmatpush1.msra.mxu0 %v1379
        %1439 = vmatprep.subr.mxu0 0.0
        %1440 = vmatpush1.msra.mxu0 %v1384
        %1441 = vmatprep.subr.mxu0 0.0
        %1442 = vmatpush1.msra.mxu0 0.0
        %1443 = vmatprep.subr.mxu0 0.0
        %1444 = vmatpush1.msra.mxu0 0.0
        %1445 = vmatprep.subr.mxu0 0.0
        %1446 = vmatpush1.msra.mxu0 0.0
        %1447 = vmatprep.subr.mxu0 0.0
        %1448 = vmatpush1.msra.mxu0 0.0
        %1449 = vmatprep.subr.mxu0 0.0
        %1450 = vmatpush1.msra.mxu0 0.0
        %1451 = vmatprep.subr.mxu0 0.0
        %1452 = vmatpush1.msra.mxu0 0.0
        %1453 = vmatprep.subr.mxu0 0.0
        %1454 = vmatpush1.msra.mxu0 0.0
        %1455 = vmatprep.subr.mxu0 0.0
        %1456 = vmatpush1.msra.mxu0 0.0
        %1457 = vmatprep.subr.mxu0 0.0
        %1458 = vmatpush1.msra.mxu0 0.0
        %1459 = vmatprep.subr.mxu0 0.0
        %1460 = vmatpush1.msra.mxu0 0.0
        %1461 = vmatprep.subr.mxu0 0.0
        %1462 = vmatpush1.msra.mxu0 0.0
        %1463 = vmatprep.subr.mxu0 0.0
        %1464 = vmatpush1.msra.mxu0 0.0
        %1465 = vmatprep.subr.mxu0 0.0
        %1466 = vmatpush1.msra.mxu0 0.0
        %1467 = vmatprep.subr.mxu0 0.0
        %1468 = vmatpush1.msra.mxu0 0.0
        %1469 = vmatprep.subr.mxu0 0.0
        %1470 = vmatpush1.msra.mxu0 0.0
        %1471 = vmatprep.subr.mxu0 0.0
        %1472 = vmatpush1.msra.mxu0 0.0
        %1473 = vmatprep.subr.mxu0 0.0
        %1474 = vmatpush1.msra.mxu0 0.0
        %1475 = vmatprep.subr.mxu0 0.0
        %1476 = vmatpush1.msra.mxu0 0.0
        %1477 = vmatprep.subr.mxu0 0.0
        %1478 = vmatpush1.msra.mxu0 0.0
        %1479 = vmatprep.subr.mxu0 0.0
        %1480 = vmatpush1.msra.mxu0 0.0
        %1481 = vmatprep.subr.mxu0 0.0
        %1482 = vmatpush1.msra.mxu0 0.0
        %1483 = vmatprep.subr.mxu0 0.0
        %1484 = vmatpush1.msra.mxu0 0.0
        %1485 = vmatprep.subr.mxu0 0.0
        %1486 = vmatpush1.msra.mxu0 0.0
        %1487 = vmatprep.subr.mxu0 0.0
        %1488 = vmatpush1.msra.mxu0 0.0
        %1489 = vmatprep.subr.mxu0 0.0
        %1490 = vmatpush1.msra.mxu0 0.0
        %1491 = vmatprep.subr.mxu0 0.0
        %1492 = vmatpush1.msra.mxu0 0.0
        %1493 = vmatprep.subr.mxu0 0.0
        %1494 = vmatpush1.msra.mxu0 0.0
        %1495 = vmatprep.subr.mxu0 0.0
        %1496 = vmatpush1.msra.mxu0 0.0
        %1497 = vmatprep.subr.mxu0 0.0
        %1498 = vmatpush1.msra.mxu0 0.0
        %1499 = vmatprep.subr.mxu0 0.0
        %1500 = vmatpush1.msra.mxu0 0.0
        %1501 = vmatprep.mubr.f32.mxu0 0.0
        %1502 = vmatmul.mubr.f32.gmra.mrb[0].mxu0 %v1414
        %v1503 = vpop.f32.mrb[0].mxu0
        %v1504 = vadd.f32 0.0, %v1503
        %v1505 = vpop.f32.mrb[0].mxu0
        %1506 = vmatprep.mubr.f32.mxu0 0.0
        %1507 = vmatmul.mubr.f32.gmra.mrb[0].mxu0 %v1417
        %v1508 = vpop.f32.mrb[0].mxu0
        %v1509 = vadd.f32 0.0, %v1508
        %v1510 = vpop.f32.mrb[0].mxu0
        %1511 = vmatprep.mubr.f32.mxu0 0.0
        %1512 = vmatmul.mubr.f32.gmra.mrb[0].mxu0 %v1420
        %v1513 = vpop.f32.mrb[0].mxu0
        %v1514 = vadd.f32 0.0, %v1513
        %v1515 = vpop.f32.mrb[0].mxu0
        %1516 = vmatprep.mubr.f32.mxu0 0.0
        %1517 = vmatmul.mubr.f32.gmra.mrb[0].mxu0 %v1423
        %v1518 = vpop.f32.mrb[0].mxu0
        %v1519 = vadd.f32 0.0, %v1518
        %v1520 = vpop.f32.mrb[0].mxu0
        %1521 = vmatprep.mubr.f32.mxu0 0.0
        %1522 = vmatmul.mubr.f32.gmra.mrb[0].mxu0 %v1426
        %v1523 = vpop.f32.mrb[0].mxu0
        %v1524 = vadd.f32 0.0, %v1523
        %v1525 = vpop.f32.mrb[0].mxu0
        %1526 = vmatprep.mubr.f32.mxu0 0.0
        %1527 = vmatmul.mubr.f32.gmra.mrb[0].mxu0 %v1429
        %v1528 = vpop.f32.mrb[0].mxu0
        %v1529 = vadd.f32 0.0, %v1528
        %v1530 = vpop.f32.mrb[0].mxu0
        %1531 = vmatprep.mubr.f32.mxu0 0.0
        %1532 = vmatmul.mubr.f32.gmra.mrb[0].mxu0 %v1432
        %v1533 = vpop.f32.mrb[0].mxu0
        %v1534 = vadd.f32 0.0, %v1533
        %v1535 = vpop.f32.mrb[0].mxu0
        %1536 = vmatprep.mubr.f32.mxu0 0.0
        %1537 = vmatmul.mubr.f32.gmra.mrb[0].mxu0 %v1435
        %v1538 = vpop.f32.mrb[0].mxu0
        %v1539 = vadd.f32 0.0, %v1538
        %v1540 = vpop.f32.mrb[0].mxu0
        %1541 = vdwg.mxu0
        %1542 = vxpose.xlu0.b32.start [1/16] %v949, 128
        %1543 = vxpose.xlu0.b32.cont [2/16] %v954, 128
        %1544 = vxpose.xlu0.b32.cont [3/16] 0.0, 128
        %1545 = vxpose.xlu0.b32.cont [4/16] 0.0, 128
        %1546 = vxpose.xlu0.b32.cont [5/16] 0.0, 128
        %1547 = vxpose.xlu0.b32.cont [6/16] 0.0, 128
        %1548 = vxpose.xlu0.b32.cont [7/16] 0.0, 128
        %1549 = vxpose.xlu0.b32.cont [8/16] 0.0, 128
        %1550 = vxpose.xlu0.b32.cont [9/16] 0.0, 128
        %1551 = vxpose.xlu0.b32.cont [10/16] 0.0, 128
        %1552 = vxpose.xlu0.b32.cont [11/16] 0.0, 128
        %1553 = vxpose.xlu0.b32.cont [12/16] 0.0, 128
        %1554 = vxpose.xlu0.b32.cont [13/16] 0.0, 128
        %1555 = vxpose.xlu0.b32.cont [14/16] 0.0, 128
        %1556 = vxpose.xlu0.b32.cont [15/16] 0.0, 128
        %1557 = vxpose.xlu0.b32.end [16/16] 0.0, 128
        %v1558 = vpop.trf.xlu0
        %v1559 = vpop.trf.xlu0
        %v1560 = vpop.trf.xlu0
        %v1561 = vpop.trf.xlu0
        %v1562 = vpop.trf.xlu0
        %v1563 = vpop.trf.xlu0
        %v1564 = vpop.trf.xlu0
        %v1565 = vpop.trf.xlu0
        %v1566 = vpop.trf.xlu0
        %v1567 = vpop.trf.xlu0
        %v1568 = vpop.trf.xlu0
        %v1569 = vpop.trf.xlu0
        %v1570 = vpop.trf.xlu0
        %v1571 = vpop.trf.xlu0
        %v1572 = vpop.trf.xlu0
        %v1573 = vpop.trf.xlu0
        %v1575 = vsel %vm1412, %v1558, 0
        %v1578 = vsel %vm1412, %v1559, 0
        %v1581 = vsel %vm1412, %v1560, 0
        %v1584 = vsel %vm1412, %v1561, 0
        %v1587 = vsel %vm1412, %v1562, 0
        %v1590 = vsel %vm1412, %v1563, 0
        %v1593 = vsel %vm1412, %v1564, 0
        %v1596 = vsel %vm1412, %v1565, 0
        %1598 = vmatprep.subr.mxu0 0.0
        %1599 = vmatpush1.msra.mxu0 %v1164
        %1600 = vmatprep.subr.mxu0 0.0
        %1601 = vmatpush1.msra.mxu0 %v1169
        %1602 = vmatprep.subr.mxu0 0.0
        %1603 = vmatpush1.msra.mxu0 0.0
        %1604 = vmatprep.subr.mxu0 0.0
        %1605 = vmatpush1.msra.mxu0 0.0
        %1606 = vmatprep.subr.mxu0 0.0
        %1607 = vmatpush1.msra.mxu0 0.0
        %1608 = vmatprep.subr.mxu0 0.0
        %1609 = vmatpush1.msra.mxu0 0.0
        %1610 = vmatprep.subr.mxu0 0.0
        %1611 = vmatpush1.msra.mxu0 0.0
        %1612 = vmatprep.subr.mxu0 0.0
        %1613 = vmatpush1.msra.mxu0 0.0
        %1614 = vmatprep.subr.mxu0 0.0
        %1615 = vmatpush1.msra.mxu0 0.0
        %1616 = vmatprep.subr.mxu0 0.0
        %1617 = vmatpush1.msra.mxu0 0.0
        %1618 = vmatprep.subr.mxu0 0.0
        %1619 = vmatpush1.msra.mxu0 0.0
        %1620 = vmatprep.subr.mxu0 0.0
        %1621 = vmatpush1.msra.mxu0 0.0
        %1622 = vmatprep.subr.mxu0 0.0
        %1623 = vmatpush1.msra.mxu0 0.0
        %1624 = vmatprep.subr.mxu0 0.0
        %1625 = vmatpush1.msra.mxu0 0.0
        %1626 = vmatprep.subr.mxu0 0.0
        %1627 = vmatpush1.msra.mxu0 0.0
        %1628 = vmatprep.subr.mxu0 0.0
        %1629 = vmatpush1.msra.mxu0 0.0
        %1630 = vmatprep.subr.mxu0 0.0
        %1631 = vmatpush1.msra.mxu0 0.0
        %1632 = vmatprep.subr.mxu0 0.0
        %1633 = vmatpush1.msra.mxu0 0.0
        %1634 = vmatprep.subr.mxu0 0.0
        %1635 = vmatpush1.msra.mxu0 0.0
        %1636 = vmatprep.subr.mxu0 0.0
        %1637 = vmatpush1.msra.mxu0 0.0
        %1638 = vmatprep.subr.mxu0 0.0
        %1639 = vmatpush1.msra.mxu0 0.0
        %1640 = vmatprep.subr.mxu0 0.0
        %1641 = vmatpush1.msra.mxu0 0.0
        %1642 = vmatprep.subr.mxu0 0.0
        %1643 = vmatpush1.msra.mxu0 0.0
        %1644 = vmatprep.subr.mxu0 0.0
        %1645 = vmatpush1.msra.mxu0 0.0
        %1646 = vmatprep.subr.mxu0 0.0
        %1647 = vmatpush1.msra.mxu0 0.0
        %1648 = vmatprep.subr.mxu0 0.0
        %1649 = vmatpush1.msra.mxu0 0.0
        %1650 = vmatprep.subr.mxu0 0.0
        %1651 = vmatpush1.msra.mxu0 0.0
        %1652 = vmatprep.subr.mxu0 0.0
        %1653 = vmatpush1.msra.mxu0 0.0
        %1654 = vmatprep.subr.mxu0 0.0
        %1655 = vmatpush1.msra.mxu0 0.0
        %1656 = vmatprep.subr.mxu0 0.0
        %1657 = vmatpush1.msra.mxu0 0.0
        %1658 = vmatprep.subr.mxu0 0.0
        %1659 = vmatpush1.msra.mxu0 0.0
        %1660 = vmatprep.subr.mxu0 0.0
        %1661 = vmatpush1.msra.mxu0 0.0
        %1662 = vmatprep.mubr.f32.mxu0 0.0
        %1663 = vmatmul.mubr.f32.gmra.mrb[0].mxu0 %v1575
        %v1664 = vpop.f32.mrb[0].mxu0
        %v1665 = vadd.f32 %v1504, %v1664
        %v1666 = vpop.f32.mrb[0].mxu0
        %1667 = vmatprep.mubr.f32.mxu0 0.0
        %1668 = vmatmul.mubr.f32.gmra.mrb[0].mxu0 %v1578
        %v1669 = vpop.f32.mrb[0].mxu0
        %v1670 = vadd.f32 %v1509, %v1669
        %v1671 = vpop.f32.mrb[0].mxu0
        %1672 = vmatprep.mubr.f32.mxu0 0.0
        %1673 = vmatmul.mubr.f32.gmra.mrb[0].mxu0 %v1581
        %v1674 = vpop.f32.mrb[0].mxu0
        %v1675 = vadd.f32 %v1514, %v1674
        %v1676 = vpop.f32.mrb[0].mxu0
        %1677 = vmatprep.mubr.f32.mxu0 0.0
        %1678 = vmatmul.mubr.f32.gmra.mrb[0].mxu0 %v1584
        %v1679 = vpop.f32.mrb[0].mxu0
        %v1680 = vadd.f32 %v1519, %v1679
        %v1681 = vpop.f32.mrb[0].mxu0
        %1682 = vmatprep.mubr.f32.mxu0 0.0
        %1683 = vmatmul.mubr.f32.gmra.mrb[0].mxu0 %v1587
        %v1684 = vpop.f32.mrb[0].mxu0
        %v1685 = vadd.f32 %v1524, %v1684
        %v1686 = vpop.f32.mrb[0].mxu0
        %1687 = vmatprep.mubr.f32.mxu0 0.0
        %1688 = vmatmul.mubr.f32.gmra.mrb[0].mxu0 %v1590
        %v1689 = vpop.f32.mrb[0].mxu0
        %v1690 = vadd.f32 %v1529, %v1689
        %v1691 = vpop.f32.mrb[0].mxu0
        %1692 = vmatprep.mubr.f32.mxu0 0.0
        %1693 = vmatmul.mubr.f32.gmra.mrb[0].mxu0 %v1593
        %v1694 = vpop.f32.mrb[0].mxu0
        %v1695 = vadd.f32 %v1534, %v1694
        %v1696 = vpop.f32.mrb[0].mxu0
        %1697 = vmatprep.mubr.f32.mxu0 0.0
        %1698 = vmatmul.mubr.f32.gmra.mrb[0].mxu0 %v1596
        %v1699 = vpop.f32.mrb[0].mxu0
        %v1700 = vadd.f32 %v1539, %v1699
        %v1701 = vpop.f32.mrb[0].mxu0
        %1702 = vdwg.mxu0
        %v1703 = vmul.f32 %v1665, %v1395
        %v1704 = vmul.f32 %v1670, %v1396
        %v1705 = vmul.f32 %v1675, %v1397
        %v1706 = vmul.f32 %v1680, %v1398
        %v1707 = vmul.f32 %v1685, %v1399
        %v1708 = vmul.f32 %v1690, %v1400
        %v1709 = vmul.f32 %v1695, %v1401
        %v1710 = vmul.f32 %v1700, %v1402
        %v1711 = vadd.f32 %v1703, %v1404
        %v1712 = vadd.f32 %v1704, %v1405
        %v1713 = vadd.f32 %v1705, %v1406
        %v1714 = vadd.f32 %v1706, %v1407
        %v1715 = vadd.f32 %v1707, %v1408
        %v1716 = vadd.f32 %v1708, %v1409
        %v1717 = vadd.f32 %v1709, %v1410
        %v1718 = vadd.f32 %v1710, %v1411
        %vm1719 = vcmask 523264
        %v1720 = vsel %vm1719, %v1711, -inf
        %1721 = vmax.xlane.f32.xlu0 %v1720
        %v1722 = vpop.xlane.xlu0 %1721
        %v1723 = vsel %vm1719, %v1712, -inf
        %1724 = vmax.xlane.f32.xlu0 %v1723
        %v1725 = vpop.xlane.xlu0 %1724
        %v1726 = vsel %vm1719, %v1713, -inf
        %1727 = vmax.xlane.f32.xlu0 %v1726
        %v1728 = vpop.xlane.xlu0 %1727
        %v1729 = vsel %vm1719, %v1714, -inf
        %1730 = vmax.xlane.f32.xlu0 %v1729
        %v1731 = vpop.xlane.xlu0 %1730
        %v1732 = vsel %vm1719, %v1715, -inf
        %1733 = vmax.xlane.f32.xlu0 %v1732
        %v1734 = vpop.xlane.xlu0 %1733
        %v1735 = vsel %vm1719, %v1716, -inf
        %1736 = vmax.xlane.f32.xlu0 %v1735
        %v1737 = vpop.xlane.xlu0 %1736
        %v1738 = vsel %vm1719, %v1717, -inf
        %1739 = vmax.xlane.f32.xlu0 %v1738
        %v1740 = vpop.xlane.xlu0 %1739
        %v1741 = vsel %vm1719, %v1718, -inf
        %1742 = vmax.xlane.f32.xlu0 %v1741
        %v1743 = vpop.xlane.xlu0 %1742
        %v1744 = vsub.f32 %v1711, %v1722
        %v1745 = vsub.f32 %v1712, %v1725
        %v1746 = vsub.f32 %v1713, %v1728
        %v1747 = vsub.f32 %v1714, %v1731
        %v1748 = vsub.f32 %v1715, %v1734
        %v1749 = vsub.f32 %v1716, %v1737
        %v1750 = vsub.f32 %v1717, %v1740
        %v1751 = vsub.f32 %v1718, %v1743
        %v1752 = vmul.f32 %v1744, 1.442695
        %v1753 = vpow.pop %v1752
        %v1754 = vmul.f32 %v1745, 1.442695
        %v1755 = vpow.pop %v1754
        %v1756 = vmul.f32 %v1746, 1.442695
        %v1757 = vpow.pop %v1756
        %v1758 = vmul.f32 %v1747, 1.442695
        %v1759 = vpow.pop %v1758
        %v1760 = vmul.f32 %v1748, 1.442695
        %v1761 = vpow.pop %v1760
        %v1762 = vmul.f32 %v1749, 1.442695
        %v1763 = vpow.pop %v1762
        %v1764 = vmul.f32 %v1750, 1.442695
        %v1765 = vpow.pop %v1764
        %v1766 = vmul.f32 %v1751, 1.442695
        %v1767 = vpow.pop %v1766
        %v1768 = vsel %vm1719, %v1753, 0.0
        %1769 = vadd.xlane.f32.xlu0 %v1768
        %v1770 = vpop.xlane.xlu0 %1769
        %v1771 = vsel %vm1719, %v1755, 0.0
        %1772 = vadd.xlane.f32.xlu0 %v1771
        %v1773 = vpop.xlane.xlu0 %1772
        %v1774 = vsel %vm1719, %v1757, 0.0
        %1775 = vadd.xlane.f32.xlu0 %v1774
        %v1776 = vpop.xlane.xlu0 %1775
        %v1777 = vsel %vm1719, %v1759, 0.0
        %1778 = vadd.xlane.f32.xlu0 %v1777
        %v1779 = vpop.xlane.xlu0 %1778
        %v1780 = vsel %vm1719, %v1761, 0.0
        %1781 = vadd.xlane.f32.xlu0 %v1780
        %v1782 = vpop.xlane.xlu0 %1781
        %v1783 = vsel %vm1719, %v1763, 0.0
        %1784 = vadd.xlane.f32.xlu0 %v1783
        %v1785 = vpop.xlane.xlu0 %1784
        %v1786 = vsel %vm1719, %v1765, 0.0
        %1787 = vadd.xlane.f32.xlu0 %v1786
        %v1788 = vpop.xlane.xlu0 %1787
        %v1789 = vsel %vm1719, %v1767, 0.0
        %1790 = vadd.xlane.f32.xlu0 %v1789
        %v1791 = vpop.xlane.xlu0 %1790
        %v1792 = vrcp.pop %v1770
        %v1793 = vrcp.pop %v1773
        %v1794 = vrcp.pop %v1776
        %v1795 = vrcp.pop %v1779
        %v1796 = vrcp.pop %v1782
        %v1797 = vrcp.pop %v1785
        %v1798 = vrcp.pop %v1788
        %v1799 = vrcp.pop %v1791
        %v1800 = vmul.f32 %v1753, %v1792
        %v1801 = vmul.f32 %v1755, %v1793
        %v1802 = vmul.f32 %v1757, %v1794
        %v1803 = vmul.f32 %v1759, %v1795
        %v1804 = vmul.f32 %v1761, %v1796
        %v1805 = vmul.f32 %v1763, %v1797
        %v1806 = vmul.f32 %v1765, %v1798
        %v1807 = vmul.f32 %v1767, %v1799
        %v1809 = vsel %vm1719, %v1800, 0
        %v1812 = vsel %vm1719, %v1801, 0
        %v1815 = vsel %vm1719, %v1802, 0
        %v1818 = vsel %vm1719, %v1803, 0
        %v1821 = vsel %vm1719, %v1804, 0
        %v1824 = vsel %vm1719, %v1805, 0
        %v1827 = vsel %vm1719, %v1806, 0
        %v1830 = vsel %vm1719, %v1807, 0
        %1832 = vmatprep.subr.mxu0 0.0
        %1833 = vmatpush1.msra.mxu0 %v1387
        %1834 = vmatprep.subr.mxu0 0.0
        %1835 = vmatpush1.msra.mxu0 %v1388
        %1836 = vmatprep.subr.mxu0 0.0
        %1837 = vmatpush1.msra.mxu0 %v1389
        %1838 = vmatprep.subr.mxu0 0.0
        %1839 = vmatpush1.msra.mxu0 %v1390
        %1840 = vmatprep.subr.mxu0 0.0
        %1841 = vmatpush1.msra.mxu0 %v1391
        %1842 = vmatprep.subr.mxu0 0.0
        %1843 = vmatpush1.msra.mxu0 %v1392
        %1844 = vmatprep.subr.mxu0 0.0
        %1845 = vmatpush1.msra.mxu0 %v1393
        %1846 = vmatprep.subr.mxu0 0.0
        %1847 = vmatpush1.msra.mxu0 %v1394
        %1848 = vmatprep.subr.mxu0 0.0
        %1849 = vmatpush1.msra.mxu0 0.0
        %1850 = vmatprep.subr.mxu0 0.0
        %1851 = vmatpush1.msra.mxu0 0.0
        %1852 = vmatprep.subr.mxu0 0.0
        %1853 = vmatpush1.msra.mxu0 0.0
        %1854 = vmatprep.subr.mxu0 0.0
        %1855 = vmatpush1.msra.mxu0 0.0
        %1856 = vmatprep.subr.mxu0 0.0
        %1857 = vmatpush1.msra.mxu0 0.0
        %1858 = vmatprep.subr.mxu0 0.0
        %1859 = vmatpush1.msra.mxu0 0.0
        %1860 = vmatprep.subr.mxu0 0.0
        %1861 = vmatpush1.msra.mxu0 0.0
        %1862 = vmatprep.subr.mxu0 0.0
        %1863 = vmatpush1.msra.mxu0 0.0
        %1864 = vmatprep.subr.mxu0 0.0
        %1865 = vmatpush1.msra.mxu0 0.0
        %1866 = vmatprep.subr.mxu0 0.0
        %1867 = vmatpush1.msra.mxu0 0.0
        %1868 = vmatprep.subr.mxu0 0.0
        %1869 = vmatpush1.msra.mxu0 0.0
        %1870 = vmatprep.subr.mxu0 0.0
        %1871 = vmatpush1.msra.mxu0 0.0
        %1872 = vmatprep.subr.mxu0 0.0
        %1873 = vmatpush1.msra.mxu0 0.0
        %1874 = vmatprep.subr.mxu0 0.0
        %1875 = vmatpush1.msra.mxu0 0.0
        %1876 = vmatprep.subr.mxu0 0.0
        %1877 = vmatpush1.msra.mxu0 0.0
        %1878 = vmatprep.subr.mxu0 0.0
        %1879 = vmatpush1.msra.mxu0 0.0
        %1880 = vmatprep.subr.mxu0 0.0
        %1881 = vmatpush1.msra.mxu0 0.0
        %1882 = vmatprep.subr.mxu0 0.0
        %1883 = vmatpush1.msra.mxu0 0.0
        %1884 = vmatprep.subr.mxu0 0.0
        %1885 = vmatpush1.msra.mxu0 0.0
        %1886 = vmatprep.subr.mxu0 0.0
        %1887 = vmatpush1.msra.mxu0 0.0
        %1888 = vmatprep.subr.mxu0 0.0
        %1889 = vmatpush1.msra.mxu0 0.0
        %1890 = vmatprep.subr.mxu0 0.0
        %1891 = vmatpush1.msra.mxu0 0.0
        %1892 = vmatprep.subr.mxu0 0.0
        %1893 = vmatpush1.msra.mxu0 0.0
        %1894 = vmatprep.subr.mxu0 0.0
        %1895 = vmatpush1.msra.mxu0 0.0
        %1896 = vmatprep.mubr.f32.mxu0 0.0
        %1897 = vmatmul.mubr.f32.gmra.mrb[0].mxu0 %v1809
        %v1898 = vpop.f32.mrb[0].mxu0
        %v1899 = vadd.f32 0.0, %v1898
        %v1900 = vpop.f32.mrb[0].mxu0
        %1901 = vmatprep.mubr.f32.mxu0 0.0
        %1902 = vmatmul.mubr.f32.gmra.mrb[0].mxu0 %v1812
        %v1903 = vpop.f32.mrb[0].mxu0
        %v1904 = vadd.f32 0.0, %v1903
        %v1905 = vpop.f32.mrb[0].mxu0
        %1906 = vmatprep.mubr.f32.mxu0 0.0
        %1907 = vmatmul.mubr.f32.gmra.mrb[0].mxu0 %v1815
        %v1908 = vpop.f32.mrb[0].mxu0
        %v1909 = vadd.f32 0.0, %v1908
        %v1910 = vpop.f32.mrb[0].mxu0
        %1911 = vmatprep.mubr.f32.mxu0 0.0
        %1912 = vmatmul.mubr.f32.gmra.mrb[0].mxu0 %v1818
        %v1913 = vpop.f32.mrb[0].mxu0
        %v1914 = vadd.f32 0.0, %v1913
        %v1915 = vpop.f32.mrb[0].mxu0
        %1916 = vmatprep.mubr.f32.mxu0 0.0
        %1917 = vmatmul.mubr.f32.gmra.mrb[0].mxu0 %v1821
        %v1918 = vpop.f32.mrb[0].mxu0
        %v1919 = vadd.f32 0.0, %v1918
        %v1920 = vpop.f32.mrb[0].mxu0
        %1921 = vmatprep.mubr.f32.mxu0 0.0
        %1922 = vmatmul.mubr.f32.gmra.mrb[0].mxu0 %v1824
        %v1923 = vpop.f32.mrb[0].mxu0
        %v1924 = vadd.f32 0.0, %v1923
        %v1925 = vpop.f32.mrb[0].mxu0
        %1926 = vmatprep.mubr.f32.mxu0 0.0
        %1927 = vmatmul.mubr.f32.gmra.mrb[0].mxu0 %v1827
        %v1928 = vpop.f32.mrb[0].mxu0
        %v1929 = vadd.f32 0.0, %v1928
        %v1930 = vpop.f32.mrb[0].mxu0
        %1931 = vmatprep.mubr.f32.mxu0 0.0
        %1932 = vmatmul.mubr.f32.gmra.mrb[0].mxu0 %v1830
        %v1933 = vpop.f32.mrb[0].mxu0
        %v1934 = vadd.f32 0.0, %v1933
        %v1935 = vpop.f32.mrb[0].mxu0
        %1936 = vdwg.mxu0
        %1937 = vst.msk [vmem:[#allocation2] sm:$0xff] %vm1412, %v1899
        %1938 = vst.msk [vmem:[#allocation2 + $0x8] sm:$0xff] %vm1412, %v1904
        %1939 = vst.msk [vmem:[#allocation2 + $0x10] sm:$0xff] %vm1412, %v1909
        %1940 = vst.msk [vmem:[#allocation2 + $0x18] sm:$0xff] %vm1412, %v1914
        %1941 = vst.msk [vmem:[#allocation2 + $0x20] sm:$0xff] %vm1412, %v1919
        %1942 = vst.msk [vmem:[#allocation2 + $0x28] sm:$0xff] %vm1412, %v1924
        %1943 = vst.msk [vmem:[#allocation2 + $0x30] sm:$0xff] %vm1412, %v1929
        %1944 = vst.msk [vmem:[#allocation2 + $0x38] sm:$0xff] %vm1412, %v1934
        %v1945 = vld [vmem:[#allocation2] sm:$0xff]
        %v1946 = vld [vmem:[#allocation2 + $0x8] sm:$0xff]
        %v1947 = vld [vmem:[#allocation2 + $0x10] sm:$0xff]
        %v1948 = vld [vmem:[#allocation2 + $0x18] sm:$0xff]
        %v1949 = vld [vmem:[#allocation2 + $0x20] sm:$0xff]
        %v1950 = vld [vmem:[#allocation2 + $0x28] sm:$0xff]
        %v1951 = vld [vmem:[#allocation2 + $0x30] sm:$0xff]
        %v1952 = vld [vmem:[#allocation2 + $0x38] sm:$0xff]
        %v1954 = vsel %vm1412, %v1945, 0
        %v1957 = vsel %vm1412, %v1946, 0
        %v1960 = vsel %vm1412, %v1947, 0
        %v1963 = vsel %vm1412, %v1948, 0
        %v1966 = vsel %vm1412, %v1949, 0
        %v1969 = vsel %vm1412, %v1950, 0
        %v1972 = vsel %vm1412, %v1951, 0
        %v1975 = vsel %vm1412, %v1952, 0
        %1977 = vmatprep.subr.mxu0 0.0
        %1978 = vmatpush1.msra.mxu0 %v719
        %1979 = vmatprep.subr.mxu0 0.0
        %1980 = vmatpush1.msra.mxu0 %v724
        %1981 = vmatprep.subr.mxu0 0.0
        %1982 = vmatpush1.msra.mxu0 0.0
        %1983 = vmatprep.subr.mxu0 0.0
        %1984 = vmatpush1.msra.mxu0 0.0
        %1985 = vmatprep.subr.mxu0 0.0
        %1986 = vmatpush1.msra.mxu0 0.0
        %1987 = vmatprep.subr.mxu0 0.0
        %1988 = vmatpush1.msra.mxu0 0.0
        %1989 = vmatprep.subr.mxu0 0.0
        %1990 = vmatpush1.msra.mxu0 0.0
        %1991 = vmatprep.subr.mxu0 0.0
        %1992 = vmatpush1.msra.mxu0 0.0
        %1993 = vmatprep.subr.mxu0 0.0
        %1994 = vmatpush1.msra.mxu0 0.0
        %1995 = vmatprep.subr.mxu0 0.0
        %1996 = vmatpush1.msra.mxu0 0.0
        %1997 = vmatprep.subr.mxu0 0.0
        %1998 = vmatpush1.msra.mxu0 0.0
        %1999 = vmatprep.subr.mxu0 0.0
        %2000 = vmatpush1.msra.mxu0 0.0
        %2001 = vmatprep.subr.mxu0 0.0
        %2002 = vmatpush1.msra.mxu0 0.0
        %2003 = vmatprep.subr.mxu0 0.0
        %2004 = vmatpush1.msra.mxu0 0.0
        %2005 = vmatprep.subr.mxu0 0.0
        %2006 = vmatpush1.msra.mxu0 0.0
        %2007 = vmatprep.subr.mxu0 0.0
        %2008 = vmatpush1.msra.mxu0 0.0
        %2009 = vmatprep.subr.mxu0 0.0
        %2010 = vmatpush1.msra.mxu0 0.0
        %2011 = vmatprep.subr.mxu0 0.0
        %2012 = vmatpush1.msra.mxu0 0.0
        %2013 = vmatprep.subr.mxu0 0.0
        %2014 = vmatpush1.msra.mxu0 0.0
        %2015 = vmatprep.subr.mxu0 0.0
        %2016 = vmatpush1.msra.mxu0 0.0
        %2017 = vmatprep.subr.mxu0 0.0
        %2018 = vmatpush1.msra.mxu0 0.0
        %2019 = vmatprep.subr.mxu0 0.0
        %2020 = vmatpush1.msra.mxu0 0.0
        %2021 = vmatprep.subr.mxu0 0.0
        %2022 = vmatpush1.msra.mxu0 0.0
        %2023 = vmatprep.subr.mxu0 0.0
        %2024 = vmatpush1.msra.mxu0 0.0
        %2025 = vmatprep.subr.mxu0 0.0
        %2026 = vmatpush1.msra.mxu0 0.0
        %2027 = vmatprep.subr.mxu0 0.0
        %2028 = vmatpush1.msra.mxu0 0.0
        %2029 = vmatprep.subr.mxu0 0.0
        %2030 = vmatpush1.msra.mxu0 0.0
        %2031 = vmatprep.subr.mxu0 0.0
        %2032 = vmatpush1.msra.mxu0 0.0
        %2033 = vmatprep.subr.mxu0 0.0
        %2034 = vmatpush1.msra.mxu0 0.0
        %2035 = vmatprep.subr.mxu0 0.0
        %2036 = vmatpush1.msra.mxu0 0.0
        %2037 = vmatprep.subr.mxu0 0.0
        %2038 = vmatpush1.msra.mxu0 0.0
        %2039 = vmatprep.subr.mxu0 0.0
        %2040 = vmatpush1.msra.mxu0 0.0
        %2041 = vmatprep.mubr.f32.mxu0 0.0
        %2042 = vmatmul.mubr.f32.gmra.mrb[0].mxu0 %v1954
        %v2043 = vpop.f32.mrb[0].mxu0
        %v2044 = vadd.f32 0.0, %v2043
        %v2045 = vpop.f32.mrb[0].mxu0
        %2046 = vmatprep.mubr.f32.mxu0 0.0
        %2047 = vmatmul.mubr.f32.gmra.mrb[0].mxu0 %v1957
        %v2048 = vpop.f32.mrb[0].mxu0
        %v2049 = vadd.f32 0.0, %v2048
        %v2050 = vpop.f32.mrb[0].mxu0
        %2051 = vmatprep.mubr.f32.mxu0 0.0
        %2052 = vmatmul.mubr.f32.gmra.mrb[0].mxu0 %v1960
        %v2053 = vpop.f32.mrb[0].mxu0
        %v2054 = vadd.f32 0.0, %v2053
        %v2055 = vpop.f32.mrb[0].mxu0
        %2056 = vmatprep.mubr.f32.mxu0 0.0
        %2057 = vmatmul.mubr.f32.gmra.mrb[0].mxu0 %v1963
        %v2058 = vpop.f32.mrb[0].mxu0
        %v2059 = vadd.f32 0.0, %v2058
        %v2060 = vpop.f32.mrb[0].mxu0
        %2061 = vmatprep.mubr.f32.mxu0 0.0
        %2062 = vmatmul.mubr.f32.gmra.mrb[0].mxu0 %v1966
        %v2063 = vpop.f32.mrb[0].mxu0
        %v2064 = vadd.f32 0.0, %v2063
        %v2065 = vpop.f32.mrb[0].mxu0
        %2066 = vmatprep.mubr.f32.mxu0 0.0
        %2067 = vmatmul.mubr.f32.gmra.mrb[0].mxu0 %v1969
        %v2068 = vpop.f32.mrb[0].mxu0
        %v2069 = vadd.f32 0.0, %v2068
        %v2070 = vpop.f32.mrb[0].mxu0
        %2071 = vmatprep.mubr.f32.mxu0 0.0
        %2072 = vmatmul.mubr.f32.gmra.mrb[0].mxu0 %v1972
        %v2073 = vpop.f32.mrb[0].mxu0
        %v2074 = vadd.f32 0.0, %v2073
        %v2075 = vpop.f32.mrb[0].mxu0
        %2076 = vmatprep.mubr.f32.mxu0 0.0
        %2077 = vmatmul.mubr.f32.gmra.mrb[0].mxu0 %v1975
        %v2078 = vpop.f32.mrb[0].mxu0
        %v2079 = vadd.f32 0.0, %v2078
        %v2080 = vpop.f32.mrb[0].mxu0
        %2081 = vdwg.mxu0
        %v2082 = vld [vmem:[%s7] sm:$0xff]
        %v2083 = vld [vmem:[%s7 + $0x8] sm:$0xff]
        %2084 = vmatprep.subr.mxu0 0.0
        %2085 = vmatpush1.msra.mxu0 %v2082
        %2086 = vmatprep.subr.mxu0 0.0
        %2087 = vmatpush1.msra.mxu0 %v2083
        %2088 = vmatprep.subr.mxu0 0.0
        %2089 = vmatpush1.msra.mxu0 0.0
        %2090 = vmatprep.subr.mxu0 0.0
        %2091 = vmatpush1.msra.mxu0 0.0
        %2092 = vmatprep.subr.mxu0 0.0
        %2093 = vmatpush1.msra.mxu0 0.0
        %2094 = vmatprep.subr.mxu0 0.0
        %2095 = vmatpush1.msra.mxu0 0.0
        %2096 = vmatprep.subr.mxu0 0.0
        %2097 = vmatpush1.msra.mxu0 0.0
        %2098 = vmatprep.subr.mxu0 0.0
        %2099 = vmatpush1.msra.mxu0 0.0
        %2100 = vmatprep.subr.mxu0 0.0
        %2101 = vmatpush1.msra.mxu0 0.0
        %2102 = vmatprep.subr.mxu0 0.0
        %2103 = vmatpush1.msra.mxu0 0.0
        %2104 = vmatprep.subr.mxu0 0.0
        %2105 = vmatpush1.msra.mxu0 0.0
        %2106 = vmatprep.subr.mxu0 0.0
        %2107 = vmatpush1.msra.mxu0 0.0
        %2108 = vmatprep.subr.mxu0 0.0
        %2109 = vmatpush1.msra.mxu0 0.0
        %2110 = vmatprep.subr.mxu0 0.0
        %2111 = vmatpush1.msra.mxu0 0.0
        %2112 = vmatprep.subr.mxu0 0.0
        %2113 = vmatpush1.msra.mxu0 0.0
        %2114 = vmatprep.subr.mxu0 0.0
        %2115 = vmatpush1.msra.mxu0 0.0
        %2116 = vmatprep.subr.mxu0 0.0
        %2117 = vmatpush1.msra.mxu0 0.0
        %2118 = vmatprep.subr.mxu0 0.0
        %2119 = vmatpush1.msra.mxu0 0.0
        %2120 = vmatprep.subr.mxu0 0.0
        %2121 = vmatpush1.msra.mxu0 0.0
        %2122 = vmatprep.subr.mxu0 0.0
        %2123 = vmatpush1.msra.mxu0 0.0
        %2124 = vmatprep.subr.mxu0 0.0
        %2125 = vmatpush1.msra.mxu0 0.0
        %2126 = vmatprep.subr.mxu0 0.0
        %2127 = vmatpush1.msra.mxu0 0.0
        %2128 = vmatprep.subr.mxu0 0.0
        %2129 = vmatpush1.msra.mxu0 0.0
        %2130 = vmatprep.subr.mxu0 0.0
        %2131 = vmatpush1.msra.mxu0 0.0
        %2132 = vmatprep.subr.mxu0 0.0
        %2133 = vmatpush1.msra.mxu0 0.0
        %2134 = vmatprep.subr.mxu0 0.0
        %2135 = vmatpush1.msra.mxu0 0.0
        %2136 = vmatprep.subr.mxu0 0.0
        %2137 = vmatpush1.msra.mxu0 0.0
        %2138 = vmatprep.subr.mxu0 0.0
        %2139 = vmatpush1.msra.mxu0 0.0
        %2140 = vmatprep.subr.mxu0 0.0
        %2141 = vmatpush1.msra.mxu0 0.0
        %2142 = vmatprep.subr.mxu0 0.0
        %2143 = vmatpush1.msra.mxu0 0.0
        %2144 = vmatprep.subr.mxu0 0.0
        %2145 = vmatpush1.msra.mxu0 0.0
        %2146 = vmatprep.subr.mxu0 0.0
        %2147 = vmatpush1.msra.mxu0 0.0
        %2148 = vmatprep.mubr.f32.mxu0 0.0
        %2149 = vmatmul.mubr.f32.gmra.mrb[0].mxu0 %v1954
        %v2150 = vpop.f32.mrb[0].mxu0
        %v2151 = vadd.f32 0.0, %v2150
        %v2152 = vpop.f32.mrb[0].mxu0
        %2153 = vmatprep.mubr.f32.mxu0 0.0
        %2154 = vmatmul.mubr.f32.gmra.mrb[0].mxu0 %v1957
        %v2155 = vpop.f32.mrb[0].mxu0
        %v2156 = vadd.f32 0.0, %v2155
        %v2157 = vpop.f32.mrb[0].mxu0
        %2158 = vmatprep.mubr.f32.mxu0 0.0
        %2159 = vmatmul.mubr.f32.gmra.mrb[0].mxu0 %v1960
        %v2160 = vpop.f32.mrb[0].mxu0
        %v2161 = vadd.f32 0.0, %v2160
        %v2162 = vpop.f32.mrb[0].mxu0
        %2163 = vmatprep.mubr.f32.mxu0 0.0
        %2164 = vmatmul.mubr.f32.gmra.mrb[0].mxu0 %v1963
        %v2165 = vpop.f32.mrb[0].mxu0
        %v2166 = vadd.f32 0.0, %v2165
        %v2167 = vpop.f32.mrb[0].mxu0
        %2168 = vmatprep.mubr.f32.mxu0 0.0
        %2169 = vmatmul.mubr.f32.gmra.mrb[0].mxu0 %v1966
        %v2170 = vpop.f32.mrb[0].mxu0
        %v2171 = vadd.f32 0.0, %v2170
        %v2172 = vpop.f32.mrb[0].mxu0
        %2173 = vmatprep.mubr.f32.mxu0 0.0
        %2174 = vmatmul.mubr.f32.gmra.mrb[0].mxu0 %v1969
        %v2175 = vpop.f32.mrb[0].mxu0
        %v2176 = vadd.f32 0.0, %v2175
        %v2177 = vpop.f32.mrb[0].mxu0
        %2178 = vmatprep.mubr.f32.mxu0 0.0
        %2179 = vmatmul.mubr.f32.gmra.mrb[0].mxu0 %v1972
        %v2180 = vpop.f32.mrb[0].mxu0
        %v2181 = vadd.f32 0.0, %v2180
        %v2182 = vpop.f32.mrb[0].mxu0
        %2183 = vmatprep.mubr.f32.mxu0 0.0
        %2184 = vmatmul.mubr.f32.gmra.mrb[0].mxu0 %v1975
        %v2185 = vpop.f32.mrb[0].mxu0
        %v2186 = vadd.f32 0.0, %v2185
        %v2187 = vpop.f32.mrb[0].mxu0
        %2188 = vdwg.mxu0
        %v2189 = vld [vmem:[%s8] sm:$0xff]
        %v2190 = vld [vmem:[%s8 + $0x8] sm:$0xff]
        %v2191 = vld [vmem:[%s8 + $0x10] sm:$0xff]
        %v2192 = vld [vmem:[%s8 + $0x18] sm:$0xff]
        %v2193 = vld [vmem:[%s8 + $0x20] sm:$0xff]
        %v2194 = vld [vmem:[%s8 + $0x28] sm:$0xff]
        %v2195 = vld [vmem:[%s8 + $0x30] sm:$0xff]
        %v2196 = vld [vmem:[%s8 + $0x38] sm:$0xff]
        %v2197 = vmul.f32 %v2151, %v2189
        %v2198 = vmul.f32 %v2156, %v2190
        %v2199 = vmul.f32 %v2161, %v2191
        %v2200 = vmul.f32 %v2166, %v2192
        %v2201 = vmul.f32 %v2171, %v2193
        %v2202 = vmul.f32 %v2176, %v2194
        %v2203 = vmul.f32 %v2181, %v2195
        %v2204 = vmul.f32 %v2186, %v2196
        %v2205 = vld [vmem:[%s9] sm:$0xff]
        %v2206 = vld [vmem:[%s9 + $0x8] sm:$0xff]
        %v2207 = vld [vmem:[%s9 + $0x10] sm:$0xff]
        %v2208 = vld [vmem:[%s9 + $0x18] sm:$0xff]
        %v2209 = vld [vmem:[%s9 + $0x20] sm:$0xff]
        %v2210 = vld [vmem:[%s9 + $0x28] sm:$0xff]
        %v2211 = vld [vmem:[%s9 + $0x30] sm:$0xff]
        %v2212 = vld [vmem:[%s9 + $0x38] sm:$0xff]
        %v2213 = vld [vmem:[%s9 + $0x40] sm:$0xff]
        %v2214 = vld [vmem:[%s9 + $0x48] sm:$0xff]
        %v2215 = vld [vmem:[%s9 + $0x50] sm:$0xff]
        %v2216 = vld [vmem:[%s9 + $0x58] sm:$0xff]
        %v2217 = vld [vmem:[%s9 + $0x60] sm:$0xff]
        %v2218 = vld [vmem:[%s9 + $0x68] sm:$0xff]
        %v2219 = vld [vmem:[%s9 + $0x70] sm:$0xff]
        %v2220 = vld [vmem:[%s9 + $0x78] sm:$0xff]
        %2221 = vmatprep.subr.mxu0 0.0
        %2222 = vmatpush1.msra.mxu0 %v2205
        %2223 = vmatprep.subr.mxu0 0.0
        %2224 = vmatpush1.msra.mxu0 %v2206
        %2225 = vmatprep.subr.mxu0 0.0
        %2226 = vmatpush1.msra.mxu0 %v2207
        %2227 = vmatprep.subr.mxu0 0.0
        %2228 = vmatpush1.msra.mxu0 %v2208
        %2229 = vmatprep.subr.mxu0 0.0
        %2230 = vmatpush1.msra.mxu0 %v2209
        %2231 = vmatprep.subr.mxu0 0.0
        %2232 = vmatpush1.msra.mxu0 %v2210
        %2233 = vmatprep.subr.mxu0 0.0
        %2234 = vmatpush1.msra.mxu0 %v2211
        %2235 = vmatprep.subr.mxu0 0.0
        %2236 = vmatpush1.msra.mxu0 %v2212
        %2237 = vmatprep.subr.mxu0 0.0
        %2238 = vmatpush1.msra.mxu0 %v2213
        %2239 = vmatprep.subr.mxu0 0.0
        %2240 = vmatpush1.msra.mxu0 %v2214
        %2241 = vmatprep.subr.mxu0 0.0
        %2242 = vmatpush1.msra.mxu0 %v2215
        %2243 = vmatprep.subr.mxu0 0.0
        %2244 = vmatpush1.msra.mxu0 %v2216
        %2245 = vmatprep.subr.mxu0 0.0
        %2246 = vmatpush1.msra.mxu0 %v2217
        %2247 = vmatprep.subr.mxu0 0.0
        %2248 = vmatpush1.msra.mxu0 %v2218
        %2249 = vmatprep.subr.mxu0 0.0
        %2250 = vmatpush1.msra.mxu0 %v2219
        %2251 = vmatprep.subr.mxu0 0.0
        %2252 = vmatpush1.msra.mxu0 %v2220
        %2253 = vmatprep.subr.mxu0 0.0
        %2254 = vmatpush1.msra.mxu0 0.0
        %2255 = vmatprep.subr.mxu0 0.0
        %2256 = vmatpush1.msra.mxu0 0.0
        %2257 = vmatprep.subr.mxu0 0.0
        %2258 = vmatpush1.msra.mxu0 0.0
        %2259 = vmatprep.subr.mxu0 0.0
        %2260 = vmatpush1.msra.mxu0 0.0
        %2261 = vmatprep.subr.mxu0 0.0
        %2262 = vmatpush1.msra.mxu0 0.0
        %2263 = vmatprep.subr.mxu0 0.0
        %2264 = vmatpush1.msra.mxu0 0.0
        %2265 = vmatprep.subr.mxu0 0.0
        %2266 = vmatpush1.msra.mxu0 0.0
        %2267 = vmatprep.subr.mxu0 0.0
        %2268 = vmatpush1.msra.mxu0 0.0
        %2269 = vmatprep.subr.mxu0 0.0
        %2270 = vmatpush1.msra.mxu0 0.0
        %2271 = vmatprep.subr.mxu0 0.0
        %2272 = vmatpush1.msra.mxu0 0.0
        %2273 = vmatprep.subr.mxu0 0.0
        %2274 = vmatpush1.msra.mxu0 0.0
        %2275 = vmatprep.subr.mxu0 0.0
        %2276 = vmatpush1.msra.mxu0 0.0
        %2277 = vmatprep.subr.mxu0 0.0
        %2278 = vmatpush1.msra.mxu0 0.0
        %2279 = vmatprep.subr.mxu0 0.0
        %2280 = vmatpush1.msra.mxu0 0.0
        %2281 = vmatprep.subr.mxu0 0.0
        %2282 = vmatpush1.msra.mxu0 0.0
        %2283 = vmatprep.subr.mxu0 0.0
        %2284 = vmatpush1.msra.mxu0 0.0
        %2285 = vmatprep.mubr.f32.mxu0 0.0
        %2286 = vmatmul.mubr.f32.gmra.mrb[0].mxu0 %v2197
        %v2287 = vpop.f32.mrb[0].mxu0
        %v2288 = vadd.f32 0.0, %v2287
        %v2289 = vpop.f32.mrb[0].mxu0
        %2290 = vmatprep.mubr.f32.mxu0 0.0
        %2291 = vmatmul.mubr.f32.gmra.mrb[0].mxu0 %v2198
        %v2292 = vpop.f32.mrb[0].mxu0
        %v2293 = vadd.f32 0.0, %v2292
        %v2294 = vpop.f32.mrb[0].mxu0
        %2295 = vmatprep.mubr.f32.mxu0 0.0
        %2296 = vmatmul.mubr.f32.gmra.mrb[0].mxu0 %v2199
        %v2297 = vpop.f32.mrb[0].mxu0
        %v2298 = vadd.f32 0.0, %v2297
        %v2299 = vpop.f32.mrb[0].mxu0
        %2300 = vmatprep.mubr.f32.mxu0 0.0
        %2301 = vmatmul.mubr.f32.gmra.mrb[0].mxu0 %v2200
        %v2302 = vpop.f32.mrb[0].mxu0
        %v2303 = vadd.f32 0.0, %v2302
        %v2304 = vpop.f32.mrb[0].mxu0
        %2305 = vmatprep.mubr.f32.mxu0 0.0
        %2306 = vmatmul.mubr.f32.gmra.mrb[0].mxu0 %v2201
        %v2307 = vpop.f32.mrb[0].mxu0
        %v2308 = vadd.f32 0.0, %v2307
        %v2309 = vpop.f32.mrb[0].mxu0
        %2310 = vmatprep.mubr.f32.mxu0 0.0
        %2311 = vmatmul.mubr.f32.gmra.mrb[0].mxu0 %v2202
        %v2312 = vpop.f32.mrb[0].mxu0
        %v2313 = vadd.f32 0.0, %v2312
        %v2314 = vpop.f32.mrb[0].mxu0
        %2315 = vmatprep.mubr.f32.mxu0 0.0
        %2316 = vmatmul.mubr.f32.gmra.mrb[0].mxu0 %v2203
        %v2317 = vpop.f32.mrb[0].mxu0
        %v2318 = vadd.f32 0.0, %v2317
        %v2319 = vpop.f32.mrb[0].mxu0
        %2320 = vmatprep.mubr.f32.mxu0 0.0
        %2321 = vmatmul.mubr.f32.gmra.mrb[0].mxu0 %v2204
        %v2322 = vpop.f32.mrb[0].mxu0
        %v2323 = vadd.f32 0.0, %v2322
        %v2324 = vpop.f32.mrb[0].mxu0
        %2325 = vdwg.mxu0
        %v2326 = vld [vmem:[%s10] sm:$0xff]
        %v2327 = vld [vmem:[%s10 + $0x8] sm:$0xff]
        %v2328 = vld [vmem:[%s10 + $0x10] sm:$0xff]
        %v2329 = vld [vmem:[%s10 + $0x18] sm:$0xff]
        %v2330 = vld [vmem:[%s10 + $0x20] sm:$0xff]
        %v2331 = vld [vmem:[%s10 + $0x28] sm:$0xff]
        %v2332 = vld [vmem:[%s10 + $0x30] sm:$0xff]
        %v2333 = vld [vmem:[%s10 + $0x38] sm:$0xff]
        %s2334 = scalar_lea.vmem %s10, 64
        %v2335 = vld [vmem:[%s2334] sm:$0xff]
        %v2336 = vld [vmem:[%s2334 + $0x8] sm:$0xff]
        %v2337 = vld [vmem:[%s2334 + $0x10] sm:$0xff]
        %v2338 = vld [vmem:[%s2334 + $0x18] sm:$0xff]
        %v2339 = vld [vmem:[%s2334 + $0x20] sm:$0xff]
        %v2340 = vld [vmem:[%s2334 + $0x28] sm:$0xff]
        %v2341 = vld [vmem:[%s2334 + $0x30] sm:$0xff]
        %v2342 = vld [vmem:[%s2334 + $0x38] sm:$0xff]
        %v2343 = vmul.f32 %v2044, %v2326
        %v2344 = vmul.f32 %v2049, %v2327
        %v2345 = vmul.f32 %v2054, %v2328
        %v2346 = vmul.f32 %v2059, %v2329
        %v2347 = vmul.f32 %v2064, %v2330
        %v2348 = vmul.f32 %v2069, %v2331
        %v2349 = vmul.f32 %v2074, %v2332
        %v2350 = vmul.f32 %v2079, %v2333
        %v2351 = vmul.f32 %v2288, %v2335
        %v2352 = vmul.f32 %v2293, %v2336
        %v2353 = vmul.f32 %v2298, %v2337
        %v2354 = vmul.f32 %v2303, %v2338
        %v2355 = vmul.f32 %v2308, %v2339
        %v2356 = vmul.f32 %v2313, %v2340
        %v2357 = vmul.f32 %v2318, %v2341
        %v2358 = vmul.f32 %v2323, %v2342
        %v2359 = vadd.f32 %v2343, %v2351
        %v2360 = vadd.f32 %v2344, %v2352
        %v2361 = vadd.f32 %v2345, %v2353
        %v2362 = vadd.f32 %v2346, %v2354
        %v2363 = vadd.f32 %v2347, %v2355
        %v2364 = vadd.f32 %v2348, %v2356
        %v2365 = vadd.f32 %v2349, %v2357
        %v2366 = vadd.f32 %v2350, %v2358
        %v2367 = vld [vmem:[%s11] sm:$0xff]
        %v2368 = vld [vmem:[%s11 + $0x8] sm:$0xff]
        %v2369 = vld [vmem:[%s12] sm:$0x1]
        %v2371 = vlaneseq
        %v2372 = vshrl.u32 %v2371, 7
        %v2373 = vsub.s32 0, %v2372
        %v2374 = vrot.slane %v2369, %v2373
        %v2377 = vsel %vm1719, %v2367, 0
        %v2380 = vsel %vm1719, %v2368, 0
        %2382 = vmatprep.subr.mxu0 0.0
        %2383 = vmatpush1.msra.mxu0 %v2359
        %2384 = vmatprep.subr.mxu0 0.0
        %2385 = vmatpush1.msra.mxu0 %v2360
        %2386 = vmatprep.subr.mxu0 0.0
        %2387 = vmatpush1.msra.mxu0 %v2361
        %2388 = vmatprep.subr.mxu0 0.0
        %2389 = vmatpush1.msra.mxu0 %v2362
        %2390 = vmatprep.subr.mxu0 0.0
        %2391 = vmatpush1.msra.mxu0 %v2363
        %2392 = vmatprep.subr.mxu0 0.0
        %2393 = vmatpush1.msra.mxu0 %v2364
        %2394 = vmatprep.subr.mxu0 0.0
        %2395 = vmatpush1.msra.mxu0 %v2365
        %2396 = vmatprep.subr.mxu0 0.0
        %2397 = vmatpush1.msra.mxu0 %v2366
        %2398 = vmatprep.subr.mxu0 0.0
        %2399 = vmatpush1.msra.mxu0 0.0
        %2400 = vmatprep.subr.mxu0 0.0
        %2401 = vmatpush1.msra.mxu0 0.0
        %2402 = vmatprep.subr.mxu0 0.0
        %2403 = vmatpush1.msra.mxu0 0.0
        %2404 = vmatprep.subr.mxu0 0.0
        %2405 = vmatpush1.msra.mxu0 0.0
        %2406 = vmatprep.subr.mxu0 0.0
        %2407 = vmatpush1.msra.mxu0 0.0
        %2408 = vmatprep.subr.mxu0 0.0
        %2409 = vmatpush1.msra.mxu0 0.0
        %2410 = vmatprep.subr.mxu0 0.0
        %2411 = vmatpush1.msra.mxu0 0.0
        %2412 = vmatprep.subr.mxu0 0.0
        %2413 = vmatpush1.msra.mxu0 0.0
        %2414 = vmatprep.subr.mxu0 0.0
        %2415 = vmatpush1.msra.mxu0 0.0
        %2416 = vmatprep.subr.mxu0 0.0
        %2417 = vmatpush1.msra.mxu0 0.0
        %2418 = vmatprep.subr.mxu0 0.0
        %2419 = vmatpush1.msra.mxu0 0.0
        %2420 = vmatprep.subr.mxu0 0.0
        %2421 = vmatpush1.msra.mxu0 0.0
        %2422 = vmatprep.subr.mxu0 0.0
        %2423 = vmatpush1.msra.mxu0 0.0
        %2424 = vmatprep.subr.mxu0 0.0
        %2425 = vmatpush1.msra.mxu0 0.0
        %2426 = vmatprep.subr.mxu0 0.0
        %2427 = vmatpush1.msra.mxu0 0.0
        %2428 = vmatprep.subr.mxu0 0.0
        %2429 = vmatpush1.msra.mxu0 0.0
        %2430 = vmatprep.subr.mxu0 0.0
        %2431 = vmatpush1.msra.mxu0 0.0
        %2432 = vmatprep.subr.mxu0 0.0
        %2433 = vmatpush1.msra.mxu0 0.0
        %2434 = vmatprep.subr.mxu0 0.0
        %2435 = vmatpush1.msra.mxu0 0.0
        %2436 = vmatprep.subr.mxu0 0.0
        %2437 = vmatpush1.msra.mxu0 0.0
        %2438 = vmatprep.subr.mxu0 0.0
        %2439 = vmatpush1.msra.mxu0 0.0
        %2440 = vmatprep.subr.mxu0 0.0
        %2441 = vmatpush1.msra.mxu0 0.0
        %2442 = vmatprep.subr.mxu0 0.0
        %2443 = vmatpush1.msra.mxu0 0.0
        %2444 = vmatprep.subr.mxu0 0.0
        %2445 = vmatpush1.msra.mxu0 0.0
        %2446 = vmatprep.mubr.f32.mxu0 0.0
        %2447 = vmatmul.mubr.f32.gmra.mrb[0].mxu0 %v2377
        %v2448 = vpop.f32.mrb[0].mxu0
        %v2449 = vadd.f32 %v2374, %v2448
        %v2450 = vpop.f32.mrb[0].mxu0
        %2451 = vmatprep.mubr.f32.mxu0 0.0
        %2452 = vmatmul.mubr.f32.gmra.mrb[0].mxu0 %v2380
        %v2453 = vpop.f32.mrb[0].mxu0
        %v2454 = vadd.f32 %v2374, %v2453
        %v2455 = vpop.f32.mrb[0].mxu0
        %2456 = vdwg.mxu0
        %2457 = vst.msk [vmem:[%s434] sm:$0xff] %vm491, %v2449
        %2458 = vst.msk [vmem:[%s434 + $0x8] sm:$0xff] %vm491, %v2454
        %s2459 = sand.u32 %s313, 1
        %s2460 = scalar_lea.sflag [#allocation4], %s2459
        %s2461 = sand.u32 %s313, 1
        %s2462 = smul.addr %s2461, 16
        %s2463 = scalar_lea.vmem [#allocation3], %s2462
        // Predicated region
        $region73: #{tpu_custom_call.1} parent=71 // pred_check
          %p2464 = pneg %p323
        $region74: #{tpu_custom_call.1} parent=71 // pred_check_branch
          %2466 = sbr.rel (%p2464) target = $region76
        $region75: #{tpu_custom_call.1} parent=71 // pred_region
          %s2467 = smul.u32 2, %s27
          %s2469 = ssub.s32 256, 256
          %2470 = vsyncadd %s2460, %s2469
          %s2471 = smul.addr %s2467, 128
          %s2472 = scalar_lea.hbm %s13, %s2471
          %s2473 = sshll.u32 %s2463, 4
          %s2474 = int_to_ptr.vmem [resolvable:$true] %s2473
          %2479 = dma.vmem_to_hbm [thread:$0]  %s2474, 256, %s2472, %s2460, 128, 128, 8
        $region76: #{tpu_custom_call.1} parent=71 // pred_fallthru
          _
      $region72: #{tpu_custom_call.1} parent=5 // pred_fallthru
        _
      %p2480 = scmp.le.s32.totalorder 2, %s22
      // Predicated region
      $region77: #{tpu_custom_call.1} parent=5 // pred_check
        %p2481 = pneg %p2480
      $region78: #{tpu_custom_call.1} parent=5 // pred_check_branch
        %2483 = sbr.rel (%p2481) target = $region80
      $region79: #{tpu_custom_call.1} parent=5 // pred_region
        %s2484 = ssub.s32 %s22, 2
        // Predicated region
        $region81: #{tpu_custom_call.1} parent=79 // pred_check
          %p2485 = pneg %p329
        $region82: #{tpu_custom_call.1} parent=79 // pred_check_branch
          %2487 = sbr.rel (%p2485) target = $region84
        $region83: #{tpu_custom_call.1} parent=79 // pred_region
          %s2488 = sand.u32 %s314, 1
          %s2489 = scalar_lea.sflag [#allocation4], %s2488
          %s2490 = sand.u32 %s314, 1
          %s2491 = smul.addr %s2490, 16
          %s2492 = scalar_lea.vmem [#allocation3], %s2491
          %2493 = dma.done %s2489, 256
        $region84: #{tpu_custom_call.1} parent=79 // pred_fallthru
          _
      $region80: #{tpu_custom_call.1} parent=5 // pred_fallthru
        _
    $region6: #{tpu_custom_call.1} parent=1 // loop_footer
      %s26 = sadd.s32 1, %s22
    $region7: #{tpu_custom_call.1} parent=1 // loop_footer_branch
      %21 = sbr.rel target = $region3
    $region8: #{tpu_custom_call.1} parent=1 // loop_exit
      _
    %2494 = vsyncpa [#allocation4], 1
    %s2495 = scalar_lea.sflag [#allocation4], 1
    %2496 = vsyncpa %s2495, 1

</llo_original>
